<compile_context>
chip_gen: v5e
topology: v5e:2x2
jax: 0.10.0
libtpu: 0.0.40
codegen_flags: <defaults>
</compile_context>

<pallas_src>
import math
import functools

import jax
import jax.numpy as jnp
import numpy as np
from jax import lax
from jax.experimental import pallas as pl
from jax.experimental.pallas import tpu as pltpu


# ---------------------------------------------------------------------------
# Pallas kernel (whole decoder, fused)
# ---------------------------------------------------------------------------

def _layernorm(y, gamma, beta, eps=1e-5):
    mu = jnp.mean(y, axis=-1, keepdims=True)
    var = jnp.mean((y - mu) ** 2, axis=-1, keepdims=True)   # biased var (PyTorch LN)
    return (y - mu) * lax.rsqrt(var + eps) * gamma + beta


def fused_decoder_kernel(x_ref, mask_ref, pool_ref,
                         wq_ref, wk_ref, wv_ref, wu_ref, bu_ref,
                         g1_ref, be1_ref, w1_ref, bf1_ref, w2_ref, bf2_ref,
                         g2_ref, be2_ref, wo_ref, bo_ref,
                         o_ref, xs_ref, *, n_heads, compute_dtype):
    # xs_ref: (M, d) resident activation scratch, M = batch_block * seq_len
    M, d = xs_ref.shape
    cd = compute_dtype
    layer = pl.program_id(1)

    @pl.when(layer == 0)
    def _load():                          # activation enters VMEM once per batch block
        xs_ref[...] = x_ref[...]

    x2 = xs_ref[...]                      # (M, d)
    scale = 1.0 / math.sqrt(d)

    def mm(a, b):
        return jnp.dot(a.astype(cd), b.astype(cd), preferred_element_type=jnp.float32)

    q = mm(x2, wq_ref[...])               # (M, h*d)
    k = mm(x2, wk_ref[...])
    v = mm(x2, wv_ref[...])

    addm = mask_ref[...]                  # (M, M) additive block-diag causal mask
    heads = []
    for i in range(n_heads):              # small static unroll (h)
        qh = q[:, i * d:(i + 1) * d]
        kh = k[:, i * d:(i + 1) * d]
        vh = v[:, i * d:(i + 1) * d]
        s = lax.dot_general(qh.astype(cd), kh.astype(cd),
                            (((1,), (1,)), ((), ())),
                            preferred_element_type=jnp.float32) * scale + addm
        s = s - jnp.max(s, axis=-1, keepdims=True)
        p = jnp.exp(s)
        p = p / jnp.sum(p, axis=-1, keepdims=True)
        heads.append(mm(p, vh))           # (M, d)
    cat = jnp.concatenate(heads, axis=-1)  # (M, h*d) lane-dense

    attended = mm(cat, wu_ref[...]) + bu_ref[...]
    x1 = _layernorm(attended + x2, g1_ref[...], be1_ref[...])

    hdn = jnp.maximum(mm(x1, w1_ref[...]) + bf1_ref[...], 0.0)
    ff = mm(hdn, w2_ref[...]) + bf2_ref[...]
    xs_ref[...] = _layernorm(ff + x1, g2_ref[...], be2_ref[...])

    @pl.when(layer == pl.num_programs(1) - 1)
    def _head():                          # fused classifier head on the last layer
        m = jnp.dot(pool_ref[...], xs_ref[...],
                    preferred_element_type=jnp.float32)        # (bb, d) mean-pool
        logits = mm(m, wo_ref[...]) + bo_ref[...]              # (bb, nc_pad)
        z = logits - jnp.max(logits, axis=-1, keepdims=True)
        lse = jnp.log(jnp.sum(jnp.exp(z), axis=-1, keepdims=True))
        o_ref[...] = z - lse


# ---------------------------------------------------------------------------
# Wrapper
# ---------------------------------------------------------------------------

def transformer_decoder_forward(token_ids, params, n_heads, *,
                                batch_block=None, compute_dtype=jnp.float32):
    # TODO(synk): token / positional embedding gathers kept in plain JAX glue.
    tok = jnp.take(params["token_emb"], token_ids, axis=0)              # (b, t, d)
    b, t, d = tok.shape
    x2d = (tok + params["pos_emb"][:t][None, :, :]).reshape(b * t, d)   # fold (b,t)->M

    depth = len(params["blocks"])
    stack = lambda name: jnp.stack([blk[name] for blk in params["blocks"]], axis=0)
    layer_ws = [stack(n) for n in
                ("wq", "wk", "wv", "wu", "bu", "g1", "be1",
                 "w1", "bf1", "w2", "bf2", "g2", "be2")]

    # classifier head weights, lane-padded to a multiple of 128 (padded bias = -1e30
    # so padded classes vanish under log_softmax; sliced away below).
    nc = params["w_out"].shape[1]
    nc_pad = ((nc + 127) // 128) * 128
    wo = jnp.zeros((d, nc_pad), jnp.float32).at[:, :nc].set(params["w_out"])
    bo = jnp.full((1, nc_pad), -1e30, dtype=jnp.float32).at[:, :nc].set(params["b_out"])

    bb = b if batch_block is None else batch_block
    assert b % bb == 0, "batch_block must divide batch"
    nb = b // bb
    M = bb * t

    # Additive causal + per-batch-element block-diagonal mask over the folded token
    # axis, and the mean-pool matrix. Built once host-side (no per-layer iota).
    # TODO(synk): for long sequences switch to flash-style KV tiling instead of (M,M).
    a = jnp.arange(M)
    same = (a[:, None] // t) == (a[None, :] // t)
    causal = (a[None, :] % t) <= (a[:, None] % t)
    addm = jnp.where(same & causal, 0.0, -1e30).astype(jnp.float32)      # (M, M)
    pool = jnp.where((a[None, :] // t) == jnp.arange(bb)[:, None],
                     1.0 / t, 0.0).astype(jnp.float32)                   # (bb, M)

    def layer_spec(w):                     # one layer's weights live at a time
        nd = w.ndim - 1
        return pl.BlockSpec((None,) + tuple(w.shape[1:]),
                            lambda i, l: (l,) + (0,) * nd)

    def const_spec(w):                     # grid-invariant small inputs
        nd = w.ndim
        return pl.BlockSpec(tuple(w.shape), lambda i, l: (0,) * nd)

    out_pad = pl.pallas_call(
        functools.partial(fused_decoder_kernel, n_heads=n_heads,
                          compute_dtype=compute_dtype),
        out_shape=jax.ShapeDtypeStruct((b, nc_pad), jnp.float32),
        grid=(nb, depth),
        in_specs=[pl.BlockSpec((M, d), lambda i, l: (i, 0)),
                  const_spec(addm), const_spec(pool)]
                 + [layer_spec(w) for w in layer_ws]
                 + [const_spec(wo), const_spec(bo)],
        out_specs=pl.BlockSpec((bb, nc_pad), lambda i, l: (i, 0)),
        scratch_shapes=[pltpu.VMEM((M, d), jnp.float32)],
        compiler_params=pltpu.CompilerParams(
            dimension_semantics=("parallel", "arbitrary")),
    )(x2d, addm, pool, *layer_ws, wo, bo)

    return out_pad[:, :nc]


# ---------------------------------------------------------------------------
# Pure-JAX reference (for correctness check)
# ---------------------------------------------------------------------------

def _ref_block(x, blk, h):
    b, t, d = x.shape
    q = x @ blk["wq"]; k = x @ blk["wk"]; v = x @ blk["wv"]             # (b, t, h*d)
    def split(arr):
        return arr.reshape(b, t, h, d).transpose(0, 2, 1, 3)            # (b, h, t, d)
    q, k, v = split(q), split(k), split(v)
    s = jnp.einsum("bhqd,bhkd->bhqk", q, k) / math.sqrt(d)
    mask = jnp.tril(jnp.ones((t, t), bool))
    s = jnp.where(mask, s, -jnp.inf)
    p = jax.nn.softmax(s, axis=-1)
    o = jnp.einsum("bhqk,bhkd->bhqd", p, v).transpose(0, 2, 1, 3).reshape(b, t, h * d)
    att = o @ blk["wu"] + blk["bu"]
    def ln(y, g, be):
        mu = y.mean(-1, keepdims=True)
        var = ((y - mu) ** 2).mean(-1, keepdims=True)
        return (y - mu) / jnp.sqrt(var + 1e-5) * g + be
    x1 = ln(att + x, blk["g1"], blk["be1"])
    ff = jnp.maximum(x1 @ blk["w1"] + blk["bf1"], 0.0) @ blk["w2"] + blk["bf2"]
    return ln(ff + x1, blk["g2"], blk["be2"])


def _ref_forward(token_ids, params, h):
    tok = params["token_emb"][token_ids]
    t = tok.shape[1]
    x = tok + params["pos_emb"][:t][None]
    for blk in params["blocks"]:
        x = _ref_block(x, blk, h)
    logits = x.mean(axis=1) @ params["w_out"] + params["b_out"]
    return jax.nn.log_softmax(logits, axis=-1)


# ---------------------------------------------------------------------------
# Deterministic parameter init + main
# ---------------------------------------------------------------------------

def init_params(key, d, h, depth, max_len, vocab_size, num_classes):
    keys = iter(jax.random.split(key, 8 + depth * 8))
    def rnd(shape, scale=0.05):
        return (scale * jax.random.normal(next(keys), shape)).astype(jnp.float32)
    params = {
        "token_emb": rnd((vocab_size, d), 0.1),
        "pos_emb": rnd((max_len, d), 0.1),
        "w_out": rnd((d, num_classes)),
        "b_out": rnd((1, num_classes)),
        "blocks": [],
    }
    for _ in range(depth):
        params["blocks"].append({
            "wq": rnd((d, d * h)), "wk": rnd((d, d * h)), "wv": rnd((d, d * h)),
            "wu": rnd((d * h, d)), "bu": rnd((1, d)),
            "g1": jnp.ones((1, d), jnp.float32), "be1": jnp.zeros((1, d), jnp.float32),
            "w1": rnd((d, 4 * d)), "bf1": rnd((1, 4 * d)),
            "w2": rnd((4 * d, d)), "bf2": rnd((1, d)),
            "g2": jnp.ones((1, d), jnp.float32), "be2": jnp.zeros((1, d), jnp.float32),
        })
    return params


if __name__ == "__main__":
    d, h, depth = 32, 4, 2
    max_len, vocab_size, num_classes = 16, 50, 10
    b, t = 2, 8

    key = jax.random.PRNGKey(0)
    pkey, tkey = jax.random.split(key)
    params = init_params(pkey, d, h, depth, max_len, vocab_size, num_classes)
    token_ids = jax.random.randint(tkey, (b, t), 0, vocab_size, dtype=jnp.int32)

    fwd = jax.jit(functools.partial(transformer_decoder_forward, n_heads=h))
    out = jax.block_until_ready(fwd(token_ids, params))

    ref = _ref_forward(token_ids, params, h)
    assert out.shape == (b, num_classes)
    np.testing.assert_allclose(np.asarray(out), np.asarray(ref), rtol=1e-4, atol=1e-4)

    print("KERNEL_OK")
</pallas_src>

<mosaic_0001>
module attributes {stable_mosaic.version = 11 : i64} {
  func.func @fused_decoder_kernel(%arg0: i32, %arg1: i32, %arg2: memref<16x32xf32, #tpu.memory_space<vmem>>, %arg3: memref<16x16xf32, #tpu.memory_space<vmem>>, %arg4: memref<2x16xf32, #tpu.memory_space<vmem>>, %arg5: memref<1x32x128xf32, #tpu.memory_space<vmem>>, %arg6: memref<1x32x128xf32, #tpu.memory_space<vmem>>, %arg7: memref<1x32x128xf32, #tpu.memory_space<vmem>>, %arg8: memref<1x128x32xf32, #tpu.memory_space<vmem>>, %arg9: memref<1x1x32xf32, #tpu.memory_space<vmem>>, %arg10: memref<1x1x32xf32, #tpu.memory_space<vmem>>, %arg11: memref<1x1x32xf32, #tpu.memory_space<vmem>>, %arg12: memref<1x32x128xf32, #tpu.memory_space<vmem>>, %arg13: memref<1x1x128xf32, #tpu.memory_space<vmem>>, %arg14: memref<1x128x32xf32, #tpu.memory_space<vmem>>, %arg15: memref<1x1x32xf32, #tpu.memory_space<vmem>>, %arg16: memref<1x1x32xf32, #tpu.memory_space<vmem>>, %arg17: memref<1x1x32xf32, #tpu.memory_space<vmem>>, %arg18: memref<32x128xf32, #tpu.memory_space<vmem>>, %arg19: memref<1x128xf32, #tpu.memory_space<vmem>>, %arg20: memref<2x128xf32, #tpu.memory_space<vmem>>, %arg21: memref<16x32xf32, #tpu.memory_space<vmem>>) attributes {dimension_semantics = [#tpu.dimension_semantics<parallel>, #tpu.dimension_semantics<arbitrary>], iteration_bounds = array<i64: 1, 2>, scalar_prefetch = 0 : i64, scratch_operands = 1 : i64, tpu.core_type = #tpu.core_type<tc>, window_params = [{transform_indices = @transform_0, window_bounds = array<i64: 16, 32>}, {pipeline_mode = #tpu.pipeline_mode<synchronous>, transform_indices = @transform_1, window_bounds = array<i64: 16, 16>}, {pipeline_mode = #tpu.pipeline_mode<synchronous>, transform_indices = @transform_2, window_bounds = array<i64: 2, 16>}, {transform_indices = @transform_3, window_bounds = array<i64: 1, 32, 128>}, {transform_indices = @transform_4, window_bounds = array<i64: 1, 32, 128>}, {transform_indices = @transform_5, window_bounds = array<i64: 1, 32, 128>}, {transform_indices = @transform_6, window_bounds = array<i64: 1, 128, 32>}, {transform_indices = @transform_7, window_bounds = array<i64: 1, 1, 32>}, {transform_indices = @transform_8, window_bounds = array<i64: 1, 1, 32>}, {transform_indices = @transform_9, window_bounds = array<i64: 1, 1, 32>}, {transform_indices = @transform_10, window_bounds = array<i64: 1, 32, 128>}, {transform_indices = @transform_11, window_bounds = array<i64: 1, 1, 128>}, {transform_indices = @transform_12, window_bounds = array<i64: 1, 128, 32>}, {transform_indices = @transform_13, window_bounds = array<i64: 1, 1, 32>}, {transform_indices = @transform_14, window_bounds = array<i64: 1, 1, 32>}, {transform_indices = @transform_15, window_bounds = array<i64: 1, 1, 32>}, {pipeline_mode = #tpu.pipeline_mode<synchronous>, transform_indices = @transform_16, window_bounds = array<i64: 32, 128>}, {pipeline_mode = #tpu.pipeline_mode<synchronous>, transform_indices = @transform_17, window_bounds = array<i64: 1, 128>}, {transform_indices = @transform_18, window_bounds = array<i64: 2, 128>}]} {
    %c0_i32 = arith.constant 0 : i32
    %0 = arith.cmpi eq, %arg1, %c0_i32 : i32
    %1 = arith.extui %0 : i1 to i32
    %c0_i32_0 = arith.constant 0 : i32
    %2 = arith.cmpi ne, %1, %c0_i32_0 : i32
    scf.if %2 {
      %c0_82 = arith.constant 0 : index
      %c0_83 = arith.constant 0 : index
      %164 = vector.load %arg2[%c0_82, %c0_83] : memref<16x32xf32, #tpu.memory_space<vmem>>, vector<16x32xf32>
      %c0_84 = arith.constant 0 : index
      %c0_85 = arith.constant 0 : index
      %165 = vector.load %arg21[%c0_84, %c0_85] : memref<16x32xf32, #tpu.memory_space<vmem>>, vector<16x32xf32>
      tpu.vector_store %arg21[%c0_84, %c0_85], %164 {strides = array<i32>} : memref<16x32xf32, #tpu.memory_space<vmem>>, vector<16x32xf32>,
    } else {
    }
    %c0 = arith.constant 0 : index
    %c0_1 = arith.constant 0 : index
    %3 = vector.load %arg21[%c0, %c0_1] : memref<16x32xf32, #tpu.memory_space<vmem>>, vector<16x32xf32>
    %c0_2 = arith.constant 0 : index
    %c0_3 = arith.constant 0 : index
    %c0_4 = arith.constant 0 : index
    %4 = vector.load %arg5[%c0_2, %c0_3, %c0_4] : memref<1x32x128xf32, #tpu.memory_space<vmem>>, vector<1x32x128xf32>
    %5 = vector.shape_cast %4 : vector<1x32x128xf32> to vector<32x128xf32>
    %cst = arith.constant dense<0.000000e+00> : vector<16x128xf32>
    %6 = tpu.matmul %3, %5, %cst {dimension_numbers = #tpu.dot_dimension_numbers<[1], [0], [0], [1], [0, 0, 1, 1], [], []>} : vector<16x32xf32>, vector<32x128xf32>, vector<16x128xf32> -> vector<16x128xf32>
    %c0_5 = arith.constant 0 : index
    %c0_6 = arith.constant 0 : index
    %c0_7 = arith.constant 0 : index
    %7 = vector.load %arg6[%c0_5, %c0_6, %c0_7] : memref<1x32x128xf32, #tpu.memory_space<vmem>>, vector<1x32x128xf32>
    %8 = vector.shape_cast %7 : vector<1x32x128xf32> to vector<32x128xf32>
    %cst_8 = arith.constant dense<0.000000e+00> : vector<16x128xf32>
    %9 = tpu.matmul %3, %8, %cst_8 {dimension_numbers = #tpu.dot_dimension_numbers<[1], [0], [0], [1], [0, 0, 1, 1], [], []>} : vector<16x32xf32>, vector<32x128xf32>, vector<16x128xf32> -> vector<16x128xf32>
    %c0_9 = arith.constant 0 : index
    %c0_10 = arith.constant 0 : index
    %c0_11 = arith.constant 0 : index
    %10 = vector.load %arg7[%c0_9, %c0_10, %c0_11] : memref<1x32x128xf32, #tpu.memory_space<vmem>>, vector<1x32x128xf32>
    %11 = vector.shape_cast %10 : vector<1x32x128xf32> to vector<32x128xf32>
    %cst_12 = arith.constant dense<0.000000e+00> : vector<16x128xf32>
    %12 = tpu.matmul %3, %11, %cst_12 {dimension_numbers = #tpu.dot_dimension_numbers<[1], [0], [0], [1], [0, 0, 1, 1], [], []>} : vector<16x32xf32>, vector<32x128xf32>, vector<16x128xf32> -> vector<16x128xf32>
    %c0_13 = arith.constant 0 : index
    %c0_14 = arith.constant 0 : index
    %13 = vector.load %arg3[%c0_13, %c0_14] : memref<16x16xf32, #tpu.memory_space<vmem>>, vector<16x16xf32>
    %14 = vector.extract_strided_slice %6 {offsets = [0, 0], sizes = [16, 32], strides = [1, 1]} : vector<16x128xf32> to vector<16x32xf32>
    %15 = vector.extract_strided_slice %9 {offsets = [0, 0], sizes = [16, 32], strides = [1, 1]} : vector<16x128xf32> to vector<16x32xf32>
    %16 = vector.extract_strided_slice %12 {offsets = [0, 0], sizes = [16, 32], strides = [1, 1]} : vector<16x128xf32> to vector<16x32xf32>
    %cst_15 = arith.constant dense<0.000000e+00> : vector<16x16xf32>
    %17 = tpu.matmul %14, %15, %cst_15 {dimension_numbers = #tpu.dot_dimension_numbers<[1], [1], [0], [0], [0, 0, 1, 0], [], []>} : vector<16x32xf32>, vector<16x32xf32>, vector<16x16xf32> -> vector<16x16xf32>
    %cst_16 = arith.constant 0.176776692 : f32
    %18 = vector.broadcast %cst_16 : f32 to vector<16x16xf32>
    %19 = arith.mulf %17, %18 : vector<16x16xf32>
    %20 = arith.addf %19, %13 : vector<16x16xf32>
    %cst_17 = arith.constant dense<0xFF800000> : vector<16xf32>
    %21 = vector.multi_reduction <maximumf>, %20, %cst_17 [1] : vector<16x16xf32> to vector<16xf32>
    %22 = vector.shape_cast %21 : vector<16xf32> to vector<16x1xf32>
    %23 = vector.broadcast %22 : vector<16x1xf32> to vector<16x16xf32>
    %24 = arith.subf %20, %23 : vector<16x16xf32>
    %25 = math.exp %24 : vector<16x16xf32>
    %cst_18 = arith.constant dense<0.000000e+00> : vector<16xf32>
    %26 = vector.multi_reduction <add>, %25, %cst_18 [1] : vector<16x16xf32> to vector<16xf32>
    %27 = vector.shape_cast %26 : vector<16xf32> to vector<16x1xf32>
    %28 = vector.broadcast %27 : vector<16x1xf32> to vector<16x16xf32>
    %29 = arith.divf %25, %28 : vector<16x16xf32>
    %cst_19 = arith.constant dense<0.000000e+00> : vector<16x32xf32>
    %30 = tpu.matmul %29, %16, %cst_19 {dimension_numbers = #tpu.dot_dimension_numbers<[1], [0], [0], [1], [0, 0, 1, 1], [], []>} : vector<16x16xf32>, vector<16x32xf32>, vector<16x32xf32> -> vector<16x32xf32>
    %31 = vector.extract_strided_slice %6 {offsets = [0, 32], sizes = [16, 32], strides = [1, 1]} : vector<16x128xf32> to vector<16x32xf32>
    %32 = vector.extract_strided_slice %9 {offsets = [0, 32], sizes = [16, 32], strides = [1, 1]} : vector<16x128xf32> to vector<16x32xf32>
    %33 = vector.extract_strided_slice %12 {offsets = [0, 32], sizes = [16, 32], strides = [1, 1]} : vector<16x128xf32> to vector<16x32xf32>
    %cst_20 = arith.constant dense<0.000000e+00> : vector<16x16xf32>
    %34 = tpu.matmul %31, %32, %cst_20 {dimension_numbers = #tpu.dot_dimension_numbers<[1], [1], [0], [0], [0, 0, 1, 0], [], []>} : vector<16x32xf32>, vector<16x32xf32>, vector<16x16xf32> -> vector<16x16xf32>
    %cst_21 = arith.constant 0.176776692 : f32
    %35 = vector.broadcast %cst_21 : f32 to vector<16x16xf32>
    %36 = arith.mulf %34, %35 : vector<16x16xf32>
    %37 = arith.addf %36, %13 : vector<16x16xf32>
    %cst_22 = arith.constant dense<0xFF800000> : vector<16xf32>
    %38 = vector.multi_reduction <maximumf>, %37, %cst_22 [1] : vector<16x16xf32> to vector<16xf32>
    %39 = vector.shape_cast %38 : vector<16xf32> to vector<16x1xf32>
    %40 = vector.broadcast %39 : vector<16x1xf32> to vector<16x16xf32>
    %41 = arith.subf %37, %40 : vector<16x16xf32>
    %42 = math.exp %41 : vector<16x16xf32>
    %cst_23 = arith.constant dense<0.000000e+00> : vector<16xf32>
    %43 = vector.multi_reduction <add>, %42, %cst_23 [1] : vector<16x16xf32> to vector<16xf32>
    %44 = vector.shape_cast %43 : vector<16xf32> to vector<16x1xf32>
    %45 = vector.broadcast %44 : vector<16x1xf32> to vector<16x16xf32>
    %46 = arith.divf %42, %45 : vector<16x16xf32>
    %cst_24 = arith.constant dense<0.000000e+00> : vector<16x32xf32>
    %47 = tpu.matmul %46, %33, %cst_24 {dimension_numbers = #tpu.dot_dimension_numbers<[1], [0], [0], [1], [0, 0, 1, 1], [], []>} : vector<16x16xf32>, vector<16x32xf32>, vector<16x32xf32> -> vector<16x32xf32>
    %48 = vector.extract_strided_slice %6 {offsets = [0, 64], sizes = [16, 32], strides = [1, 1]} : vector<16x128xf32> to vector<16x32xf32>
    %49 = vector.extract_strided_slice %9 {offsets = [0, 64], sizes = [16, 32], strides = [1, 1]} : vector<16x128xf32> to vector<16x32xf32>
    %50 = vector.extract_strided_slice %12 {offsets = [0, 64], sizes = [16, 32], strides = [1, 1]} : vector<16x128xf32> to vector<16x32xf32>
    %cst_25 = arith.constant dense<0.000000e+00> : vector<16x16xf32>
    %51 = tpu.matmul %48, %49, %cst_25 {dimension_numbers = #tpu.dot_dimension_numbers<[1], [1], [0], [0], [0, 0, 1, 0], [], []>} : vector<16x32xf32>, vector<16x32xf32>, vector<16x16xf32> -> vector<16x16xf32>
    %cst_26 = arith.constant 0.176776692 : f32
    %52 = vector.broadcast %cst_26 : f32 to vector<16x16xf32>
    %53 = arith.mulf %51, %52 : vector<16x16xf32>
    %54 = arith.addf %53, %13 : vector<16x16xf32>
    %cst_27 = arith.constant dense<0xFF800000> : vector<16xf32>
    %55 = vector.multi_reduction <maximumf>, %54, %cst_27 [1] : vector<16x16xf32> to vector<16xf32>
    %56 = vector.shape_cast %55 : vector<16xf32> to vector<16x1xf32>
    %57 = vector.broadcast %56 : vector<16x1xf32> to vector<16x16xf32>
    %58 = arith.subf %54, %57 : vector<16x16xf32>
    %59 = math.exp %58 : vector<16x16xf32>
    %cst_28 = arith.constant dense<0.000000e+00> : vector<16xf32>
    %60 = vector.multi_reduction <add>, %59, %cst_28 [1] : vector<16x16xf32> to vector<16xf32>
    %61 = vector.shape_cast %60 : vector<16xf32> to vector<16x1xf32>
    %62 = vector.broadcast %61 : vector<16x1xf32> to vector<16x16xf32>
    %63 = arith.divf %59, %62 : vector<16x16xf32>
    %cst_29 = arith.constant dense<0.000000e+00> : vector<16x32xf32>
    %64 = tpu.matmul %63, %50, %cst_29 {dimension_numbers = #tpu.dot_dimension_numbers<[1], [0], [0], [1], [0, 0, 1, 1], [], []>} : vector<16x16xf32>, vector<16x32xf32>, vector<16x32xf32> -> vector<16x32xf32>
    %65 = vector.extract_strided_slice %6 {offsets = [0, 96], sizes = [16, 32], strides = [1, 1]} : vector<16x128xf32> to vector<16x32xf32>
    %66 = vector.extract_strided_slice %9 {offsets = [0, 96], sizes = [16, 32], strides = [1, 1]} : vector<16x128xf32> to vector<16x32xf32>
    %67 = vector.extract_strided_slice %12 {offsets = [0, 96], sizes = [16, 32], strides = [1, 1]} : vector<16x128xf32> to vector<16x32xf32>
    %cst_30 = arith.constant dense<0.000000e+00> : vector<16x16xf32>
    %68 = tpu.matmul %65, %66, %cst_30 {dimension_numbers = #tpu.dot_dimension_numbers<[1], [1], [0], [0], [0, 0, 1, 0], [], []>} : vector<16x32xf32>, vector<16x32xf32>, vector<16x16xf32> -> vector<16x16xf32>
    %cst_31 = arith.constant 0.176776692 : f32
    %69 = vector.broadcast %cst_31 : f32 to vector<16x16xf32>
    %70 = arith.mulf %68, %69 : vector<16x16xf32>
    %71 = arith.addf %70, %13 : vector<16x16xf32>
    %cst_32 = arith.constant dense<0xFF800000> : vector<16xf32>
    %72 = vector.multi_reduction <maximumf>, %71, %cst_32 [1] : vector<16x16xf32> to vector<16xf32>
    %73 = vector.shape_cast %72 : vector<16xf32> to vector<16x1xf32>
    %74 = vector.broadcast %73 : vector<16x1xf32> to vector<16x16xf32>
    %75 = arith.subf %71, %74 : vector<16x16xf32>
    %76 = math.exp %75 : vector<16x16xf32>
    %cst_33 = arith.constant dense<0.000000e+00> : vector<16xf32>
    %77 = vector.multi_reduction <add>, %76, %cst_33 [1] : vector<16x16xf32> to vector<16xf32>
    %78 = vector.shape_cast %77 : vector<16xf32> to vector<16x1xf32>
    %79 = vector.broadcast %78 : vector<16x1xf32> to vector<16x16xf32>
    %80 = arith.divf %76, %79 : vector<16x16xf32>
    %cst_34 = arith.constant dense<0.000000e+00> : vector<16x32xf32>
    %81 = tpu.matmul %80, %67, %cst_34 {dimension_numbers = #tpu.dot_dimension_numbers<[1], [0], [0], [1], [0, 0, 1, 1], [], []>} : vector<16x16xf32>, vector<16x32xf32>, vector<16x32xf32> -> vector<16x32xf32>
    %82 = tpu.concatenate %30, %47, %64, %81 in 1 : vector<16x32xf32>, vector<16x32xf32>, vector<16x32xf32>, vector<16x32xf32> -> vector<16x128xf32>
    %c0_35 = arith.constant 0 : index
    %c0_36 = arith.constant 0 : index
    %c0_37 = arith.constant 0 : index
    %83 = vector.load %arg8[%c0_35, %c0_36, %c0_37] : memref<1x128x32xf32, #tpu.memory_space<vmem>>, vector<1x128x32xf32>
    %84 = vector.shape_cast %83 : vector<1x128x32xf32> to vector<128x32xf32>
    %cst_38 = arith.constant dense<0.000000e+00> : vector<16x32xf32>
    %85 = tpu.matmul %82, %84, %cst_38 {dimension_numbers = #tpu.dot_dimension_numbers<[1], [0], [0], [1], [0, 0, 1, 1], [], []>} : vector<16x128xf32>, vector<128x32xf32>, vector<16x32xf32> -> vector<16x32xf32>
    %c0_39 = arith.constant 0 : index
    %c0_40 = arith.constant 0 : index
    %c0_41 = arith.constant 0 : index
    %86 = vector.load %arg9[%c0_39, %c0_40, %c0_41] : memref<1x1x32xf32, #tpu.memory_space<vmem>>, vector<1x1x32xf32>
    %87 = vector.shape_cast %86 : vector<1x1x32xf32> to vector<1x32xf32>
    %88 = vector.broadcast %87 : vector<1x32xf32> to vector<16x32xf32>
    %89 = arith.addf %85, %88 : vector<16x32xf32>
    %90 = arith.addf %89, %3 : vector<16x32xf32>
    %c0_42 = arith.constant 0 : index
    %c0_43 = arith.constant 0 : index
    %c0_44 = arith.constant 0 : index
    %91 = vector.load %arg10[%c0_42, %c0_43, %c0_44] : memref<1x1x32xf32, #tpu.memory_space<vmem>>, vector<1x1x32xf32>
    %92 = vector.shape_cast %91 : vector<1x1x32xf32> to vector<1x32xf32>
    %c0_45 = arith.constant 0 : index
    %c0_46 = arith.constant 0 : index
    %c0_47 = arith.constant 0 : index
    %93 = vector.load %arg11[%c0_45, %c0_46, %c0_47] : memref<1x1x32xf32, #tpu.memory_space<vmem>>, vector<1x1x32xf32>
    %94 = vector.shape_cast %93 : vector<1x1x32xf32> to vector<1x32xf32>
    %cst_48 = arith.constant dense<0.000000e+00> : vector<16xf32>
    %95 = vector.multi_reduction <add>, %90, %cst_48 [1] : vector<16x32xf32> to vector<16xf32>
    %96 = vector.shape_cast %95 : vector<16xf32> to vector<16x1xf32>
    %cst_49 = arith.constant 3.200000e+01 : f32
    %97 = vector.broadcast %cst_49 : f32 to vector<16x1xf32>
    %98 = arith.divf %96, %97 : vector<16x1xf32>
    %99 = vector.broadcast %98 : vector<16x1xf32> to vector<16x32xf32>
    %100 = arith.subf %90, %99 : vector<16x32xf32>
    %101 = arith.mulf %100, %100 : vector<16x32xf32>
    %cst_50 = arith.constant dense<0.000000e+00> : vector<16xf32>
    %102 = vector.multi_reduction <add>, %101, %cst_50 [1] : vector<16x32xf32> to vector<16xf32>
    %103 = vector.shape_cast %102 : vector<16xf32> to vector<16x1xf32>
    %cst_51 = arith.constant 3.200000e+01 : f32
    %104 = vector.broadcast %cst_51 : f32 to vector<16x1xf32>
    %105 = arith.divf %103, %104 : vector<16x1xf32>
    %106 = vector.broadcast %98 : vector<16x1xf32> to vector<16x32xf32>
    %107 = arith.subf %90, %106 : vector<16x32xf32>
    %cst_52 = arith.constant 9.99999974E-6 : f32
    %108 = vector.broadcast %cst_52 : f32 to vector<16x1xf32>
    %109 = arith.addf %105, %108 : vector<16x1xf32>
    %110 = math.rsqrt %109 : vector<16x1xf32>
    %111 = vector.broadcast %110 : vector<16x1xf32> to vector<16x32xf32>
    %112 = arith.mulf %107, %111 : vector<16x32xf32>
    %113 = vector.broadcast %92 : vector<1x32xf32> to vector<16x32xf32>
    %114 = arith.mulf %112, %113 : vector<16x32xf32>
    %115 = vector.broadcast %94 : vector<1x32xf32> to vector<16x32xf32>
    %116 = arith.addf %114, %115 : vector<16x32xf32>
    %c0_53 = arith.constant 0 : index
    %c0_54 = arith.constant 0 : index
    %c0_55 = arith.constant 0 : index
    %117 = vector.load %arg12[%c0_53, %c0_54, %c0_55] : memref<1x32x128xf32, #tpu.memory_space<vmem>>, vector<1x32x128xf32>
    %118 = vector.shape_cast %117 : vector<1x32x128xf32> to vector<32x128xf32>
    %cst_56 = arith.constant dense<0.000000e+00> : vector<16x128xf32>
    %119 = tpu.matmul %116, %118, %cst_56 {dimension_numbers = #tpu.dot_dimension_numbers<[1], [0], [0], [1], [0, 0, 1, 1], [], []>} : vector<16x32xf32>, vector<32x128xf32>, vector<16x128xf32> -> vector<16x128xf32>
    %c0_57 = arith.constant 0 : index
    %c0_58 = arith.constant 0 : index
    %c0_59 = arith.constant 0 : index
    %120 = vector.load %arg13[%c0_57, %c0_58, %c0_59] : memref<1x1x128xf32, #tpu.memory_space<vmem>>, vector<1x1x128xf32>
    %121 = vector.shape_cast %120 : vector<1x1x128xf32> to vector<1x128xf32>
    %122 = vector.broadcast %121 : vector<1x128xf32> to vector<16x128xf32>
    %123 = arith.addf %119, %122 : vector<16x128xf32>
    %cst_60 = arith.constant 0.000000e+00 : f32
    %124 = vector.broadcast %cst_60 : f32 to vector<16x128xf32>
    %125 = arith.maximumf %123, %124 : vector<16x128xf32>
    %c0_61 = arith.constant 0 : index
    %c0_62 = arith.constant 0 : index
    %c0_63 = arith.constant 0 : index
    %126 = vector.load %arg14[%c0_61, %c0_62, %c0_63] : memref<1x128x32xf32, #tpu.memory_space<vmem>>, vector<1x128x32xf32>
    %127 = vector.shape_cast %126 : vector<1x128x32xf32> to vector<128x32xf32>
    %cst_64 = arith.constant dense<0.000000e+00> : vector<16x32xf32>
    %128 = tpu.matmul %125, %127, %cst_64 {dimension_numbers = #tpu.dot_dimension_numbers<[1], [0], [0], [1], [0, 0, 1, 1], [], []>} : vector<16x128xf32>, vector<128x32xf32>, vector<16x32xf32> -> vector<16x32xf32>
    %c0_65 = arith.constant 0 : index
    %c0_66 = arith.constant 0 : index
    %c0_67 = arith.constant 0 : index
    %129 = vector.load %arg15[%c0_65, %c0_66, %c0_67] : memref<1x1x32xf32, #tpu.memory_space<vmem>>, vector<1x1x32xf32>
    %130 = vector.shape_cast %129 : vector<1x1x32xf32> to vector<1x32xf32>
    %131 = vector.broadcast %130 : vector<1x32xf32> to vector<16x32xf32>
    %132 = arith.addf %128, %131 : vector<16x32xf32>
    %133 = arith.addf %132, %116 : vector<16x32xf32>
    %c0_68 = arith.constant 0 : index
    %c0_69 = arith.constant 0 : index
    %c0_70 = arith.constant 0 : index
    %134 = vector.load %arg16[%c0_68, %c0_69, %c0_70] : memref<1x1x32xf32, #tpu.memory_space<vmem>>, vector<1x1x32xf32>
    %135 = vector.shape_cast %134 : vector<1x1x32xf32> to vector<1x32xf32>
    %c0_71 = arith.constant 0 : index
    %c0_72 = arith.constant 0 : index
    %c0_73 = arith.constant 0 : index
    %136 = vector.load %arg17[%c0_71, %c0_72, %c0_73] : memref<1x1x32xf32, #tpu.memory_space<vmem>>, vector<1x1x32xf32>
    %137 = vector.shape_cast %136 : vector<1x1x32xf32> to vector<1x32xf32>
    %cst_74 = arith.constant dense<0.000000e+00> : vector<16xf32>
    %138 = vector.multi_reduction <add>, %133, %cst_74 [1] : vector<16x32xf32> to vector<16xf32>
    %139 = vector.shape_cast %138 : vector<16xf32> to vector<16x1xf32>
    %cst_75 = arith.constant 3.200000e+01 : f32
    %140 = vector.broadcast %cst_75 : f32 to vector<16x1xf32>
    %141 = arith.divf %139, %140 : vector<16x1xf32>
    %142 = vector.broadcast %141 : vector<16x1xf32> to vector<16x32xf32>
    %143 = arith.subf %133, %142 : vector<16x32xf32>
    %144 = arith.mulf %143, %143 : vector<16x32xf32>
    %cst_76 = arith.constant dense<0.000000e+00> : vector<16xf32>
    %145 = vector.multi_reduction <add>, %144, %cst_76 [1] : vector<16x32xf32> to vector<16xf32>
    %146 = vector.shape_cast %145 : vector<16xf32> to vector<16x1xf32>
    %cst_77 = arith.constant 3.200000e+01 : f32
    %147 = vector.broadcast %cst_77 : f32 to vector<16x1xf32>
    %148 = arith.divf %146, %147 : vector<16x1xf32>
    %149 = vector.broadcast %141 : vector<16x1xf32> to vector<16x32xf32>
    %150 = arith.subf %133, %149 : vector<16x32xf32>
    %cst_78 = arith.constant 9.99999974E-6 : f32
    %151 = vector.broadcast %cst_78 : f32 to vector<16x1xf32>
    %152 = arith.addf %148, %151 : vector<16x1xf32>
    %153 = math.rsqrt %152 : vector<16x1xf32>
    %154 = vector.broadcast %153 : vector<16x1xf32> to vector<16x32xf32>
    %155 = arith.mulf %150, %154 : vector<16x32xf32>
    %156 = vector.broadcast %135 : vector<1x32xf32> to vector<16x32xf32>
    %157 = arith.mulf %155, %156 : vector<16x32xf32>
    %158 = vector.broadcast %137 : vector<1x32xf32> to vector<16x32xf32>
    %159 = arith.addf %157, %158 : vector<16x32xf32>
    %c0_79 = arith.constant 0 : index
    %c0_80 = arith.constant 0 : index
    %160 = vector.load %arg21[%c0_79, %c0_80] : memref<16x32xf32, #tpu.memory_space<vmem>>, vector<16x32xf32>
    tpu.vector_store %arg21[%c0_79, %c0_80], %159 {strides = array<i32>} : memref<16x32xf32, #tpu.memory_space<vmem>>, vector<16x32xf32>,
    %c1_i32 = arith.constant 1 : i32
    %161 = arith.cmpi eq, %arg1, %c1_i32 : i32
    %162 = arith.extui %161 : i1 to i32
    %c0_i32_81 = arith.constant 0 : i32
    %163 = arith.cmpi ne, %162, %c0_i32_81 : i32
    scf.if %163 {
      %c0_82 = arith.constant 0 : index
      %c0_83 = arith.constant 0 : index
      %164 = vector.load %arg4[%c0_82, %c0_83] : memref<2x16xf32, #tpu.memory_space<vmem>>, vector<2x16xf32>
      %c0_84 = arith.constant 0 : index
      %c0_85 = arith.constant 0 : index
      %165 = vector.load %arg21[%c0_84, %c0_85] : memref<16x32xf32, #tpu.memory_space<vmem>>, vector<16x32xf32>
      %cst_86 = arith.constant dense<0.000000e+00> : vector<2x32xf32>
      %166 = tpu.matmul %164, %165, %cst_86 {dimension_numbers = #tpu.dot_dimension_numbers<[1], [0], [0], [1], [0, 0, 1, 1], [], []>} : vector<2x16xf32>, vector<16x32xf32>, vector<2x32xf32> -> vector<2x32xf32>
      %c0_87 = arith.constant 0 : index
      %c0_88 = arith.constant 0 : index
      %167 = vector.load %arg18[%c0_87, %c0_88] : memref<32x128xf32, #tpu.memory_space<vmem>>, vector<32x128xf32>
      %cst_89 = arith.constant dense<0.000000e+00> : vector<2x128xf32>
      %168 = tpu.matmul %166, %167, %cst_89 {dimension_numbers = #tpu.dot_dimension_numbers<[1], [0], [0], [1], [0, 0, 1, 1], [], []>} : vector<2x32xf32>, vector<32x128xf32>, vector<2x128xf32> -> vector<2x128xf32>
      %c0_90 = arith.constant 0 : index
      %c0_91 = arith.constant 0 : index
      %169 = vector.load %arg19[%c0_90, %c0_91] : memref<1x128xf32, #tpu.memory_space<vmem>>, vector<1x128xf32>
      %170 = vector.broadcast %169 : vector<1x128xf32> to vector<2x128xf32>
      %171 = arith.addf %168, %170 : vector<2x128xf32>
      %cst_92 = arith.constant dense<0xFF800000> : vector<2xf32>
      %172 = vector.multi_reduction <maximumf>, %171, %cst_92 [1] : vector<2x128xf32> to vector<2xf32>
      %173 = vector.shape_cast %172 : vector<2xf32> to vector<2x1xf32>
      %174 = vector.broadcast %173 : vector<2x1xf32> to vector<2x128xf32>
      %175 = arith.subf %171, %174 : vector<2x128xf32>
      %176 = math.exp %175 : vector<2x128xf32>
      %cst_93 = arith.constant dense<0.000000e+00> : vector<2xf32>
      %177 = vector.multi_reduction <add>, %176, %cst_93 [1] : vector<2x128xf32> to vector<2xf32>
      %178 = vector.shape_cast %177 : vector<2xf32> to vector<2x1xf32>
      %179 = math.log %178 : vector<2x1xf32>
      %180 = vector.broadcast %179 : vector<2x1xf32> to vector<2x128xf32>
      %181 = arith.subf %175, %180 : vector<2x128xf32>
      %c0_94 = arith.constant 0 : index
      %c0_95 = arith.constant 0 : index
      %182 = vector.load %arg20[%c0_94, %c0_95] : memref<2x128xf32, #tpu.memory_space<vmem>>, vector<2x128xf32>
      tpu.vector_store %arg20[%c0_94, %c0_95], %181 {strides = array<i32>} : memref<2x128xf32, #tpu.memory_space<vmem>>, vector<2x128xf32>,
    } else {
    }
    return
  }
  func.func @transform_0(%arg0: i32, %arg1: i32) -> (i32, i32) {
    %c0_i32 = arith.constant 0 : i32
    %c0_i32_0 = arith.constant 0 : i32
    return %arg0, %c0_i32 : i32, i32
  }
  func.func @transform_1(%arg0: i32, %arg1: i32) -> (i32, i32) {
    %c0_i32 = arith.constant 0 : i32
    %c0_i32_0 = arith.constant 0 : i32
    %c0_i32_1 = arith.constant 0 : i32
    return %c0_i32, %c0_i32_0 : i32, i32
  }
  func.func @transform_2(%arg0: i32, %arg1: i32) -> (i32, i32) {
    %c0_i32 = arith.constant 0 : i32
    %c0_i32_0 = arith.constant 0 : i32
    %c0_i32_1 = arith.constant 0 : i32
    return %c0_i32, %c0_i32_0 : i32, i32
  }
  func.func @transform_3(%arg0: i32, %arg1: i32) -> (i32, i32, i32) {
    %c0_i32 = arith.constant 0 : i32
    %c0_i32_0 = arith.constant 0 : i32
    %c0_i32_1 = arith.constant 0 : i32
    return %arg1, %c0_i32, %c0_i32_0 : i32, i32, i32
  }
  func.func @transform_4(%arg0: i32, %arg1: i32) -> (i32, i32, i32) {
    %c0_i32 = arith.constant 0 : i32
    %c0_i32_0 = arith.constant 0 : i32
    %c0_i32_1 = arith.constant 0 : i32
    return %arg1, %c0_i32, %c0_i32_0 : i32, i32, i32
  }
  func.func @transform_5(%arg0: i32, %arg1: i32) -> (i32, i32, i32) {
    %c0_i32 = arith.constant 0 : i32
    %c0_i32_0 = arith.constant 0 : i32
    %c0_i32_1 = arith.constant 0 : i32
    return %arg1, %c0_i32, %c0_i32_0 : i32, i32, i32
  }
  func.func @transform_6(%arg0: i32, %arg1: i32) -> (i32, i32, i32) {
    %c0_i32 = arith.constant 0 : i32
    %c0_i32_0 = arith.constant 0 : i32
    %c0_i32_1 = arith.constant 0 : i32
    return %arg1, %c0_i32, %c0_i32_0 : i32, i32, i32
  }
  func.func @transform_7(%arg0: i32, %arg1: i32) -> (i32, i32, i32) {
    %c0_i32 = arith.constant 0 : i32
    %c0_i32_0 = arith.constant 0 : i32
    %c0_i32_1 = arith.constant 0 : i32
    return %arg1, %c0_i32, %c0_i32_0 : i32, i32, i32
  }
  func.func @transform_8(%arg0: i32, %arg1: i32) -> (i32, i32, i32) {
    %c0_i32 = arith.constant 0 : i32
    %c0_i32_0 = arith.constant 0 : i32
    %c0_i32_1 = arith.constant 0 : i32
    return %arg1, %c0_i32, %c0_i32_0 : i32, i32, i32
  }
  func.func @transform_9(%arg0: i32, %arg1: i32) -> (i32, i32, i32) {
    %c0_i32 = arith.constant 0 : i32
    %c0_i32_0 = arith.constant 0 : i32
    %c0_i32_1 = arith.constant 0 : i32
    return %arg1, %c0_i32, %c0_i32_0 : i32, i32, i32
  }
  func.func @transform_10(%arg0: i32, %arg1: i32) -> (i32, i32, i32) {
    %c0_i32 = arith.constant 0 : i32
    %c0_i32_0 = arith.constant 0 : i32
    %c0_i32_1 = arith.constant 0 : i32
    return %arg1, %c0_i32, %c0_i32_0 : i32, i32, i32
  }
  func.func @transform_11(%arg0: i32, %arg1: i32) -> (i32, i32, i32) {
    %c0_i32 = arith.constant 0 : i32
    %c0_i32_0 = arith.constant 0 : i32
    %c0_i32_1 = arith.constant 0 : i32
    return %arg1, %c0_i32, %c0_i32_0 : i32, i32, i32
  }
  func.func @transform_12(%arg0: i32, %arg1: i32) -> (i32, i32, i32) {
    %c0_i32 = arith.constant 0 : i32
    %c0_i32_0 = arith.constant 0 : i32
    %c0_i32_1 = arith.constant 0 : i32
    return %arg1, %c0_i32, %c0_i32_0 : i32, i32, i32
  }
  func.func @transform_13(%arg0: i32, %arg1: i32) -> (i32, i32, i32) {
    %c0_i32 = arith.constant 0 : i32
    %c0_i32_0 = arith.constant 0 : i32
    %c0_i32_1 = arith.constant 0 : i32
    return %arg1, %c0_i32, %c0_i32_0 : i32, i32, i32
  }
  func.func @transform_14(%arg0: i32, %arg1: i32) -> (i32, i32, i32) {
    %c0_i32 = arith.constant 0 : i32
    %c0_i32_0 = arith.constant 0 : i32
    %c0_i32_1 = arith.constant 0 : i32
    return %arg1, %c0_i32, %c0_i32_0 : i32, i32, i32
  }
  func.func @transform_15(%arg0: i32, %arg1: i32) -> (i32, i32, i32) {
    %c0_i32 = arith.constant 0 : i32
    %c0_i32_0 = arith.constant 0 : i32
    %c0_i32_1 = arith.constant 0 : i32
    return %arg1, %c0_i32, %c0_i32_0 : i32, i32, i32
  }
  func.func @transform_16(%arg0: i32, %arg1: i32) -> (i32, i32) {
    %c0_i32 = arith.constant 0 : i32
    %c0_i32_0 = arith.constant 0 : i32
    %c0_i32_1 = arith.constant 0 : i32
    return %c0_i32, %c0_i32_0 : i32, i32
  }
  func.func @transform_17(%arg0: i32, %arg1: i32) -> (i32, i32) {
    %c0_i32 = arith.constant 0 : i32
    %c0_i32_0 = arith.constant 0 : i32
    %c0_i32_1 = arith.constant 0 : i32
    return %c0_i32, %c0_i32_0 : i32, i32
  }
  func.func @transform_18(%arg0: i32, %arg1: i32) -> (i32, i32) {
    %c0_i32 = arith.constant 0 : i32
    %c0_i32_0 = arith.constant 0 : i32
    return %arg0, %c0_i32 : i32, i32
  }
}

</mosaic_0001>

<llo_original>
// kernel: transformer_decoder_forward.1
$region0: #{transformer_decoder_forward.1}
  #allocation0 [shape = 'u32[]', space=smem, size = 0x4, offset = 0x4, fixed_abs, tag = 'smem constant byte address 0x4 - core index']
  #allocation1 [shape = 'u32[72,128]{1,0:T(1,128)}', space=vmem, size = 0x9000, scoped, tag = 'internal scratch']
  #allocation2 [shape = 'f32[16,32]{1,0:T(8,128)}', space=vmem, size = 0x2000, scoped, tag = 'scratch operand']
  %s0 = inlined_call_operand.vmem [shape: f32[16,32], index: 0, kind: input, shape index: {}]
  %s1 = inlined_call_operand.vmem [shape: f32[16,16], index: 1, kind: input, shape index: {}]
  %s2 = inlined_call_operand.vmem [shape: f32[2,16], index: 2, kind: input, shape index: {}]
  %s3 = inlined_call_operand.vmem [shape: f32[2,32,128], index: 3, kind: input, shape index: {}]
  %s4 = inlined_call_operand.vmem [shape: f32[2,32,128], index: 4, kind: input, shape index: {}]
  %s5 = inlined_call_operand.vmem [shape: f32[2,32,128], index: 5, kind: input, shape index: {}]
  %s6 = inlined_call_operand.vmem [shape: f32[2,128,32], index: 6, kind: input, shape index: {}]
  %s7 = inlined_call_operand.vmem [shape: f32[2,1,32], index: 7, kind: input, shape index: {}]
  %s8 = inlined_call_operand.vmem [shape: f32[2,1,32], index: 8, kind: input, shape index: {}]
  %s9 = inlined_call_operand.vmem [shape: f32[2,1,32], index: 9, kind: input, shape index: {}]
  %s10 = inlined_call_operand.vmem [shape: f32[2,32,128], index: 10, kind: input, shape index: {}]
  %s11 = inlined_call_operand.vmem [shape: f32[2,1,128], index: 11, kind: input, shape index: {}]
  %s12 = inlined_call_operand.vmem [shape: f32[2,128,32], index: 12, kind: input, shape index: {}]
  %s13 = inlined_call_operand.vmem [shape: f32[2,1,32], index: 13, kind: input, shape index: {}]
  %s14 = inlined_call_operand.vmem [shape: f32[2,1,32], index: 14, kind: input, shape index: {}]
  %s15 = inlined_call_operand.vmem [shape: f32[2,1,32], index: 15, kind: input, shape index: {}]
  %s16 = inlined_call_operand.vmem [shape: f32[32,128], index: 16, kind: input, shape index: {}]
  %s17 = inlined_call_operand.vmem [shape: f32[1,128], index: 17, kind: input, shape index: {}]
  %s18 = inlined_call_operand.hbm [shape: f32[2,128], index: 18, kind: output, shape index: {}]
  %s19 = sld [smem:[#allocation0]]
  $region113: #{transformer_decoder_forward.1} parent=0
    _
  %s21 = ssub.s32 1, %s19
  %s22 = scalar_select 0, %s21, %s19
  $region1: #{transformer_decoder_forward.1} parent=0
    #allocation3 [shape = 'u8[1024]{0}', space=vmem, size = 0x400, scoped, tag = 'output window, operand 0, single buffered']
    #allocation4 [shape = 's32[2]{0}', space=sflag, size = 0x8, scoped, tag = 'scoped memory for transformer_decoder_forward.1']
    %23 = vsyncpa [#allocation4], 0
    loop: start=0, step=1, limit=4
    $region2: #{transformer_decoder_forward.1} parent=1 // loop_pre_header
      _
    $region3: #{transformer_decoder_forward.1} parent=1 // loop_header
      %s25 = sphi 0, %s29
      %p26 = scmp.ge.s32.totalorder %s25, 4
      %s32 = sphi 0, %s44
      %s33 = sphi 0, %s40
      %s34 = sphi 0, %s32
      %s35 = sphi 0, %s33
      %s36 = sphi 0, %s34
      %s37 = sphi 0, %s35
      %s47 = sphi 0, %s49
      %s50 = sphi 0, %s47
      %s51 = sphi 0, %s50
      %s67 = sphi 0, %s51
      %s71 = sphi 0, %s71
      %s73 = sphi 0, %s71
      %s74 = sphi 0, %s73
      %s88 = sphi 0, %s74
      %s92 = sphi 0, %s92
      %s94 = sphi 0, %s92
      %s95 = sphi 0, %s94
      %s109 = sphi 0, %s95
      %s115 = sphi 0, %s117
      %s118 = sphi 0, %s115
      %s119 = sphi 0, %s118
      %s135 = sphi 0, %s119
      %s141 = sphi 0, %s143
      %s144 = sphi 0, %s141
      %s145 = sphi 0, %s144
      %s161 = sphi 0, %s145
      %s167 = sphi 0, %s169
      %s170 = sphi 0, %s167
      %s171 = sphi 0, %s170
      %s187 = sphi 0, %s171
      %s193 = sphi 0, %s195
      %s196 = sphi 0, %s193
      %s197 = sphi 0, %s196
      %s213 = sphi 0, %s197
      %s219 = sphi 0, %s221
      %s222 = sphi 0, %s219
      %s223 = sphi 0, %s222
      %s239 = sphi 0, %s223
      %s245 = sphi 0, %s247
      %s248 = sphi 0, %s245
      %s249 = sphi 0, %s248
      %s265 = sphi 0, %s249
      %s271 = sphi 0, %s273
      %s274 = sphi 0, %s271
      %s275 = sphi 0, %s274
      %s291 = sphi 0, %s275
      %s297 = sphi 0, %s299
      %s300 = sphi 0, %s297
      %s301 = sphi 0, %s300
      %s317 = sphi 0, %s301
      %s323 = sphi 0, %s325
      %s326 = sphi 0, %s323
      %s327 = sphi 0, %s326
      %s343 = sphi 0, %s327
      %s349 = sphi 0, %s351
      %s352 = sphi 0, %s349
      %s353 = sphi 0, %s352
      %s369 = sphi 0, %s353
      %s375 = sphi 0, %s377
      %s378 = sphi 0, %s375
      %s379 = sphi 0, %s378
      %s395 = sphi 0, %s379
      %s401 = sphi 0, %s403
      %s404 = sphi 0, %s401
      %s405 = sphi 0, %s404
      %s421 = sphi 0, %s405
      %s427 = sphi 0, %s429
      %s430 = sphi 0, %s427
      %s431 = sphi 0, %s430
      %s447 = sphi 0, %s431
      %s451 = sphi 0, %s451
      %s453 = sphi 0, %s451
      %s454 = sphi 0, %s453
      %s468 = sphi 0, %s454
      %s472 = sphi 0, %s472
      %s474 = sphi 0, %s472
      %s475 = sphi 0, %s474
      %s489 = sphi 0, %s475
      %s495 = sphi 0, %s497
      %s498 = sphi 0, %s495
      %s499 = sphi 0, %s498
      %s515 = sphi 0, %s499
    $region4: #{transformer_decoder_forward.1} parent=1 // loop_header_branch
      %28 = sbr.rel (%p26) target = $region8
    $region5: #{transformer_decoder_forward.1} parent=1 // loop_body
      %s30 = ssub.s32 %s25, 1
      %s31 = ssub.s32 %s25, 2
      %s38 = sadd.s32 1, %s33
      %p39 = scmp.ge.s32.totalorder %s38, 2
      %s40 = scalar_select %p39, 0, %s38
      %s41 = sadd.s32 1, %s32
      %s42 = scalar_select %p39, %s41, %s32
      %p43 = scmp.ge.s32.totalorder %s42, 1
      %s44 = scalar_select %p43, 0, %s42
      %s45 = ssub.s32 %s32, %s44
      %p46 = scmp.eq.s32.totalorder %s45, 0
      %s48 = sadd.s32 %s47, 1
      %s49 = scalar_select %p46, %s47, %s48
      %p52 = pneg %p46
      %p53 = scmp.eq.s32.totalorder %s25, 1
      %p54 = por %p52, %p53
      %p55 = scmp.ne.s32.totalorder %s47, %s50
      %p56 = scmp.eq.s32.totalorder %s25, 0
      %p57 = por %p55, %p56
      %p58 = scmp.ne.s32.totalorder %s47, %s50
      %p59 = scmp.eq.s32.totalorder %s30, 1
      %p60 = por %p58, %p59
      %p61 = scmp.ne.s32.totalorder %s50, %s51
      %p62 = scmp.eq.s32.totalorder %s30, 0
      %p63 = por %p61, %p62
      %p64 = scmp.ne.s32.totalorder %s50, %s51
      %p65 = scmp.eq.s32.totalorder %s31, 1
      %p66 = por %p64, %p65
      %p68 = scmp.ne.s32.totalorder %s51, %s67
      %p69 = scmp.eq.s32.totalorder %s31, 0
      %p70 = por %p68, %p69
      %s72 = sadd.s32 %s71, 1
      %p75 = scmp.eq.s32.totalorder %s25, 1
      %p76 = scmp.ne.s32.totalorder %s71, %s73
      %p77 = scmp.eq.s32.totalorder %s25, 0
      %p78 = por %p76, %p77
      %p79 = scmp.ne.s32.totalorder %s71, %s73
      %p80 = scmp.eq.s32.totalorder %s30, 1
      %p81 = por %p79, %p80
      %p82 = scmp.ne.s32.totalorder %s73, %s74
      %p83 = scmp.eq.s32.totalorder %s30, 0
      %p84 = por %p82, %p83
      %p85 = scmp.ne.s32.totalorder %s73, %s74
      %p86 = scmp.eq.s32.totalorder %s31, 1
      %p87 = por %p85, %p86
      %p89 = scmp.ne.s32.totalorder %s74, %s88
      %p90 = scmp.eq.s32.totalorder %s31, 0
      %p91 = por %p89, %p90
      %s93 = sadd.s32 %s92, 1
      %p96 = scmp.eq.s32.totalorder %s25, 1
      %p97 = scmp.ne.s32.totalorder %s92, %s94
      %p98 = scmp.eq.s32.totalorder %s25, 0
      %p99 = por %p97, %p98
      %p100 = scmp.ne.s32.totalorder %s92, %s94
      %p101 = scmp.eq.s32.totalorder %s30, 1
      %p102 = por %p100, %p101
      %p103 = scmp.ne.s32.totalorder %s94, %s95
      %p104 = scmp.eq.s32.totalorder %s30, 0
      %p105 = por %p103, %p104
      %p106 = scmp.ne.s32.totalorder %s94, %s95
      %p107 = scmp.eq.s32.totalorder %s31, 1
      %p108 = por %p106, %p107
      %p110 = scmp.ne.s32.totalorder %s95, %s109
      %p111 = scmp.eq.s32.totalorder %s31, 0
      %p112 = por %p110, %p111
      %s113 = ssub.s32 %s33, %s40
      %p114 = scmp.eq.s32.totalorder %s113, 0
      %s116 = sadd.s32 %s115, 1
      %s117 = scalar_select %p114, %s115, %s116
      %p120 = pneg %p114
      %p121 = scmp.eq.s32.totalorder %s25, 1
      %p122 = por %p120, %p121
      %p123 = scmp.ne.s32.totalorder %s115, %s118
      %p124 = scmp.eq.s32.totalorder %s25, 0
      %p125 = por %p123, %p124
      %p126 = scmp.ne.s32.totalorder %s115, %s118
      %p127 = scmp.eq.s32.totalorder %s30, 1
      %p128 = por %p126, %p127
      %p129 = scmp.ne.s32.totalorder %s118, %s119
      %p130 = scmp.eq.s32.totalorder %s30, 0
      %p131 = por %p129, %p130
      %p132 = scmp.ne.s32.totalorder %s118, %s119
      %p133 = scmp.eq.s32.totalorder %s31, 1
      %p134 = por %p132, %p133
      %p136 = scmp.ne.s32.totalorder %s119, %s135
      %p137 = scmp.eq.s32.totalorder %s31, 0
      %p138 = por %p136, %p137
      %s139 = ssub.s32 %s33, %s40
      %p140 = scmp.eq.s32.totalorder %s139, 0
      %s142 = sadd.s32 %s141, 1
      %s143 = scalar_select %p140, %s141, %s142
      %p146 = pneg %p140
      %p147 = scmp.eq.s32.totalorder %s25, 1
      %p148 = por %p146, %p147
      %p149 = scmp.ne.s32.totalorder %s141, %s144
      %p150 = scmp.eq.s32.totalorder %s25, 0
      %p151 = por %p149, %p150
      %p152 = scmp.ne.s32.totalorder %s141, %s144
      %p153 = scmp.eq.s32.totalorder %s30, 1
      %p154 = por %p152, %p153
      %p155 = scmp.ne.s32.totalorder %s144, %s145
      %p156 = scmp.eq.s32.totalorder %s30, 0
      %p157 = por %p155, %p156
      %p158 = scmp.ne.s32.totalorder %s144, %s145
      %p159 = scmp.eq.s32.totalorder %s31, 1
      %p160 = por %p158, %p159
      %p162 = scmp.ne.s32.totalorder %s145, %s161
      %p163 = scmp.eq.s32.totalorder %s31, 0
      %p164 = por %p162, %p163
      %s165 = ssub.s32 %s33, %s40
      %p166 = scmp.eq.s32.totalorder %s165, 0
      %s168 = sadd.s32 %s167, 1
      %s169 = scalar_select %p166, %s167, %s168
      %p172 = pneg %p166
      %p173 = scmp.eq.s32.totalorder %s25, 1
      %p174 = por %p172, %p173
      %p175 = scmp.ne.s32.totalorder %s167, %s170
      %p176 = scmp.eq.s32.totalorder %s25, 0
      %p177 = por %p175, %p176
      %p178 = scmp.ne.s32.totalorder %s167, %s170
      %p179 = scmp.eq.s32.totalorder %s30, 1
      %p180 = por %p178, %p179
      %p181 = scmp.ne.s32.totalorder %s170, %s171
      %p182 = scmp.eq.s32.totalorder %s30, 0
      %p183 = por %p181, %p182
      %p184 = scmp.ne.s32.totalorder %s170, %s171
      %p185 = scmp.eq.s32.totalorder %s31, 1
      %p186 = por %p184, %p185
      %p188 = scmp.ne.s32.totalorder %s171, %s187
      %p189 = scmp.eq.s32.totalorder %s31, 0
      %p190 = por %p188, %p189
      %s191 = ssub.s32 %s33, %s40
      %p192 = scmp.eq.s32.totalorder %s191, 0
      %s194 = sadd.s32 %s193, 1
      %s195 = scalar_select %p192, %s193, %s194
      %p198 = pneg %p192
      %p199 = scmp.eq.s32.totalorder %s25, 1
      %p200 = por %p198, %p199
      %p201 = scmp.ne.s32.totalorder %s193, %s196
      %p202 = scmp.eq.s32.totalorder %s25, 0
      %p203 = por %p201, %p202
      %p204 = scmp.ne.s32.totalorder %s193, %s196
      %p205 = scmp.eq.s32.totalorder %s30, 1
      %p206 = por %p204, %p205
      %p207 = scmp.ne.s32.totalorder %s196, %s197
      %p208 = scmp.eq.s32.totalorder %s30, 0
      %p209 = por %p207, %p208
      %p210 = scmp.ne.s32.totalorder %s196, %s197
      %p211 = scmp.eq.s32.totalorder %s31, 1
      %p212 = por %p210, %p211
      %p214 = scmp.ne.s32.totalorder %s197, %s213
      %p215 = scmp.eq.s32.totalorder %s31, 0
      %p216 = por %p214, %p215
      %s217 = ssub.s32 %s33, %s40
      %p218 = scmp.eq.s32.totalorder %s217, 0
      %s220 = sadd.s32 %s219, 1
      %s221 = scalar_select %p218, %s219, %s220
      %p224 = pneg %p218
      %p225 = scmp.eq.s32.totalorder %s25, 1
      %p226 = por %p224, %p225
      %p227 = scmp.ne.s32.totalorder %s219, %s222
      %p228 = scmp.eq.s32.totalorder %s25, 0
      %p229 = por %p227, %p228
      %p230 = scmp.ne.s32.totalorder %s219, %s222
      %p231 = scmp.eq.s32.totalorder %s30, 1
      %p232 = por %p230, %p231
      %p233 = scmp.ne.s32.totalorder %s222, %s223
      %p234 = scmp.eq.s32.totalorder %s30, 0
      %p235 = por %p233, %p234
      %p236 = scmp.ne.s32.totalorder %s222, %s223
      %p237 = scmp.eq.s32.totalorder %s31, 1
      %p238 = por %p236, %p237
      %p240 = scmp.ne.s32.totalorder %s223, %s239
      %p241 = scmp.eq.s32.totalorder %s31, 0
      %p242 = por %p240, %p241
      %s243 = ssub.s32 %s33, %s40
      %p244 = scmp.eq.s32.totalorder %s243, 0
      %s246 = sadd.s32 %s245, 1
      %s247 = scalar_select %p244, %s245, %s246
      %p250 = pneg %p244
      %p251 = scmp.eq.s32.totalorder %s25, 1
      %p252 = por %p250, %p251
      %p253 = scmp.ne.s32.totalorder %s245, %s248
      %p254 = scmp.eq.s32.totalorder %s25, 0
      %p255 = por %p253, %p254
      %p256 = scmp.ne.s32.totalorder %s245, %s248
      %p257 = scmp.eq.s32.totalorder %s30, 1
      %p258 = por %p256, %p257
      %p259 = scmp.ne.s32.totalorder %s248, %s249
      %p260 = scmp.eq.s32.totalorder %s30, 0
      %p261 = por %p259, %p260
      %p262 = scmp.ne.s32.totalorder %s248, %s249
      %p263 = scmp.eq.s32.totalorder %s31, 1
      %p264 = por %p262, %p263
      %p266 = scmp.ne.s32.totalorder %s249, %s265
      %p267 = scmp.eq.s32.totalorder %s31, 0
      %p268 = por %p266, %p267
      %s269 = ssub.s32 %s33, %s40
      %p270 = scmp.eq.s32.totalorder %s269, 0
      %s272 = sadd.s32 %s271, 1
      %s273 = scalar_select %p270, %s271, %s272
      %p276 = pneg %p270
      %p277 = scmp.eq.s32.totalorder %s25, 1
      %p278 = por %p276, %p277
      %p279 = scmp.ne.s32.totalorder %s271, %s274
      %p280 = scmp.eq.s32.totalorder %s25, 0
      %p281 = por %p279, %p280
      %p282 = scmp.ne.s32.totalorder %s271, %s274
      %p283 = scmp.eq.s32.totalorder %s30, 1
      %p284 = por %p282, %p283
      %p285 = scmp.ne.s32.totalorder %s274, %s275
      %p286 = scmp.eq.s32.totalorder %s30, 0
      %p287 = por %p285, %p286
      %p288 = scmp.ne.s32.totalorder %s274, %s275
      %p289 = scmp.eq.s32.totalorder %s31, 1
      %p290 = por %p288, %p289
      %p292 = scmp.ne.s32.totalorder %s275, %s291
      %p293 = scmp.eq.s32.totalorder %s31, 0
      %p294 = por %p292, %p293
      %s295 = ssub.s32 %s33, %s40
      %p296 = scmp.eq.s32.totalorder %s295, 0
      %s298 = sadd.s32 %s297, 1
      %s299 = scalar_select %p296, %s297, %s298
      %p302 = pneg %p296
      %p303 = scmp.eq.s32.totalorder %s25, 1
      %p304 = por %p302, %p303
      %p305 = scmp.ne.s32.totalorder %s297, %s300
      %p306 = scmp.eq.s32.totalorder %s25, 0
      %p307 = por %p305, %p306
      %p308 = scmp.ne.s32.totalorder %s297, %s300
      %p309 = scmp.eq.s32.totalorder %s30, 1
      %p310 = por %p308, %p309
      %p311 = scmp.ne.s32.totalorder %s300, %s301
      %p312 = scmp.eq.s32.totalorder %s30, 0
      %p313 = por %p311, %p312
      %p314 = scmp.ne.s32.totalorder %s300, %s301
      %p315 = scmp.eq.s32.totalorder %s31, 1
      %p316 = por %p314, %p315
      %p318 = scmp.ne.s32.totalorder %s301, %s317
      %p319 = scmp.eq.s32.totalorder %s31, 0
      %p320 = por %p318, %p319
      %s321 = ssub.s32 %s33, %s40
      %p322 = scmp.eq.s32.totalorder %s321, 0
      %s324 = sadd.s32 %s323, 1
      %s325 = scalar_select %p322, %s323, %s324
      %p328 = pneg %p322
      %p329 = scmp.eq.s32.totalorder %s25, 1
      %p330 = por %p328, %p329
      %p331 = scmp.ne.s32.totalorder %s323, %s326
      %p332 = scmp.eq.s32.totalorder %s25, 0
      %p333 = por %p331, %p332
      %p334 = scmp.ne.s32.totalorder %s323, %s326
      %p335 = scmp.eq.s32.totalorder %s30, 1
      %p336 = por %p334, %p335
      %p337 = scmp.ne.s32.totalorder %s326, %s327
      %p338 = scmp.eq.s32.totalorder %s30, 0
      %p339 = por %p337, %p338
      %p340 = scmp.ne.s32.totalorder %s326, %s327
      %p341 = scmp.eq.s32.totalorder %s31, 1
      %p342 = por %p340, %p341
      %p344 = scmp.ne.s32.totalorder %s327, %s343
      %p345 = scmp.eq.s32.totalorder %s31, 0
      %p346 = por %p344, %p345
      %s347 = ssub.s32 %s33, %s40
      %p348 = scmp.eq.s32.totalorder %s347, 0
      %s350 = sadd.s32 %s349, 1
      %s351 = scalar_select %p348, %s349, %s350
      %p354 = pneg %p348
      %p355 = scmp.eq.s32.totalorder %s25, 1
      %p356 = por %p354, %p355
      %p357 = scmp.ne.s32.totalorder %s349, %s352
      %p358 = scmp.eq.s32.totalorder %s25, 0
      %p359 = por %p357, %p358
      %p360 = scmp.ne.s32.totalorder %s349, %s352
      %p361 = scmp.eq.s32.totalorder %s30, 1
      %p362 = por %p360, %p361
      %p363 = scmp.ne.s32.totalorder %s352, %s353
      %p364 = scmp.eq.s32.totalorder %s30, 0
      %p365 = por %p363, %p364
      %p366 = scmp.ne.s32.totalorder %s352, %s353
      %p367 = scmp.eq.s32.totalorder %s31, 1
      %p368 = por %p366, %p367
      %p370 = scmp.ne.s32.totalorder %s353, %s369
      %p371 = scmp.eq.s32.totalorder %s31, 0
      %p372 = por %p370, %p371
      %s373 = ssub.s32 %s33, %s40
      %p374 = scmp.eq.s32.totalorder %s373, 0
      %s376 = sadd.s32 %s375, 1
      %s377 = scalar_select %p374, %s375, %s376
      %p380 = pneg %p374
      %p381 = scmp.eq.s32.totalorder %s25, 1
      %p382 = por %p380, %p381
      %p383 = scmp.ne.s32.totalorder %s375, %s378
      %p384 = scmp.eq.s32.totalorder %s25, 0
      %p385 = por %p383, %p384
      %p386 = scmp.ne.s32.totalorder %s375, %s378
      %p387 = scmp.eq.s32.totalorder %s30, 1
      %p388 = por %p386, %p387
      %p389 = scmp.ne.s32.totalorder %s378, %s379
      %p390 = scmp.eq.s32.totalorder %s30, 0
      %p391 = por %p389, %p390
      %p392 = scmp.ne.s32.totalorder %s378, %s379
      %p393 = scmp.eq.s32.totalorder %s31, 1
      %p394 = por %p392, %p393
      %p396 = scmp.ne.s32.totalorder %s379, %s395
      %p397 = scmp.eq.s32.totalorder %s31, 0
      %p398 = por %p396, %p397
      %s399 = ssub.s32 %s33, %s40
      %p400 = scmp.eq.s32.totalorder %s399, 0
      %s402 = sadd.s32 %s401, 1
      %s403 = scalar_select %p400, %s401, %s402
      %p406 = pneg %p400
      %p407 = scmp.eq.s32.totalorder %s25, 1
      %p408 = por %p406, %p407
      %p409 = scmp.ne.s32.totalorder %s401, %s404
      %p410 = scmp.eq.s32.totalorder %s25, 0
      %p411 = por %p409, %p410
      %p412 = scmp.ne.s32.totalorder %s401, %s404
      %p413 = scmp.eq.s32.totalorder %s30, 1
      %p414 = por %p412, %p413
      %p415 = scmp.ne.s32.totalorder %s404, %s405
      %p416 = scmp.eq.s32.totalorder %s30, 0
      %p417 = por %p415, %p416
      %p418 = scmp.ne.s32.totalorder %s404, %s405
      %p419 = scmp.eq.s32.totalorder %s31, 1
      %p420 = por %p418, %p419
      %p422 = scmp.ne.s32.totalorder %s405, %s421
      %p423 = scmp.eq.s32.totalorder %s31, 0
      %p424 = por %p422, %p423
      %s425 = ssub.s32 %s33, %s40
      %p426 = scmp.eq.s32.totalorder %s425, 0
      %s428 = sadd.s32 %s427, 1
      %s429 = scalar_select %p426, %s427, %s428
      %p432 = pneg %p426
      %p433 = scmp.eq.s32.totalorder %s25, 1
      %p434 = por %p432, %p433
      %p435 = scmp.ne.s32.totalorder %s427, %s430
      %p436 = scmp.eq.s32.totalorder %s25, 0
      %p437 = por %p435, %p436
      %p438 = scmp.ne.s32.totalorder %s427, %s430
      %p439 = scmp.eq.s32.totalorder %s30, 1
      %p440 = por %p438, %p439
      %p441 = scmp.ne.s32.totalorder %s430, %s431
      %p442 = scmp.eq.s32.totalorder %s30, 0
      %p443 = por %p441, %p442
      %p444 = scmp.ne.s32.totalorder %s430, %s431
      %p445 = scmp.eq.s32.totalorder %s31, 1
      %p446 = por %p444, %p445
      %p448 = scmp.ne.s32.totalorder %s431, %s447
      %p449 = scmp.eq.s32.totalorder %s31, 0
      %p450 = por %p448, %p449
      %s452 = sadd.s32 %s451, 1
      %p455 = scmp.eq.s32.totalorder %s25, 1
      %p456 = scmp.ne.s32.totalorder %s451, %s453
      %p457 = scmp.eq.s32.totalorder %s25, 0
      %p458 = por %p456, %p457
      %p459 = scmp.ne.s32.totalorder %s451, %s453
      %p460 = scmp.eq.s32.totalorder %s30, 1
      %p461 = por %p459, %p460
      %p462 = scmp.ne.s32.totalorder %s453, %s454
      %p463 = scmp.eq.s32.totalorder %s30, 0
      %p464 = por %p462, %p463
      %p465 = scmp.ne.s32.totalorder %s453, %s454
      %p466 = scmp.eq.s32.totalorder %s31, 1
      %p467 = por %p465, %p466
      %p469 = scmp.ne.s32.totalorder %s454, %s468
      %p470 = scmp.eq.s32.totalorder %s31, 0
      %p471 = por %p469, %p470
      %s473 = sadd.s32 %s472, 1
      %p476 = scmp.eq.s32.totalorder %s25, 1
      %p477 = scmp.ne.s32.totalorder %s472, %s474
      %p478 = scmp.eq.s32.totalorder %s25, 0
      %p479 = por %p477, %p478
      %p480 = scmp.ne.s32.totalorder %s472, %s474
      %p481 = scmp.eq.s32.totalorder %s30, 1
      %p482 = por %p480, %p481
      %p483 = scmp.ne.s32.totalorder %s474, %s475
      %p484 = scmp.eq.s32.totalorder %s30, 0
      %p485 = por %p483, %p484
      %p486 = scmp.ne.s32.totalorder %s474, %s475
      %p487 = scmp.eq.s32.totalorder %s31, 1
      %p488 = por %p486, %p487
      %p490 = scmp.ne.s32.totalorder %s475, %s489
      %p491 = scmp.eq.s32.totalorder %s31, 0
      %p492 = por %p490, %p491
      %s493 = ssub.s32 %s32, %s44
      %p494 = scmp.eq.s32.totalorder %s493, 0
      %s496 = sadd.s32 %s495, 1
      %s497 = scalar_select %p494, %s495, %s496
      %p500 = pneg %p494
      %p501 = scmp.eq.s32.totalorder %s25, 1
      %p502 = por %p500, %p501
      %p503 = scmp.ne.s32.totalorder %s495, %s498
      %p504 = scmp.eq.s32.totalorder %s25, 0
      %p505 = por %p503, %p504
      %p506 = scmp.ne.s32.totalorder %s495, %s498
      %p507 = scmp.eq.s32.totalorder %s30, 1
      %p508 = por %p506, %p507
      %p509 = scmp.ne.s32.totalorder %s498, %s499
      %p510 = scmp.eq.s32.totalorder %s30, 0
      %p511 = por %p509, %p510
      %p512 = scmp.ne.s32.totalorder %s498, %s499
      %p513 = scmp.eq.s32.totalorder %s31, 1
      %p514 = por %p512, %p513
      %p516 = scmp.ne.s32.totalorder %s499, %s515
      %p517 = scmp.eq.s32.totalorder %s31, 0
      %p518 = por %p516, %p517
      %p519 = scmp.le.s32.totalorder 1, %s25
      %p520 = scmp.lt.s32.totalorder %s25, 3
      %p521 = pnand %p519, %p520
      %p522 = pneg %p521
      // Predicated region
      $region9: #{transformer_decoder_forward.1} parent=5 // pred_check
        _
      $region10: #{transformer_decoder_forward.1} parent=5 // pred_check_branch
        %524 = sbr.rel (%p521) target = $region12
      $region11: #{transformer_decoder_forward.1} parent=5 // pred_region
        %s525 = ssub.s32 %s25, 1
        // Predicated region
        $region13: #{transformer_decoder_forward.1} parent=11 // pred_check
          %p526 = pneg %p63
        $region14: #{transformer_decoder_forward.1} parent=11 // pred_check_branch
          %528 = sbr.rel (%p526) target = $region16
        $region15: #{transformer_decoder_forward.1} parent=11 // pred_region
          %s529 = smul.u32 2, %s34
          %p530 = scmp.lt.s32.totalorder %s529, 1
          %s531 = scalar_select %p530, %s529, 1
          %s532 = smul.addr %s531, 8
          %s533 = scalar_lea.vmem %s0, %s532
          %s534 = smul.u32 2, %s34
        $region16: #{transformer_decoder_forward.1} parent=11 // pred_fallthru
          _
        // Predicated region
        $region17: #{transformer_decoder_forward.1} parent=11 // pred_check
          %p535 = pneg %p84
        $region18: #{transformer_decoder_forward.1} parent=11 // pred_check_branch
          %537 = sbr.rel (%p535) target = $region20
        $region19: #{transformer_decoder_forward.1} parent=11 // pred_region
          _
        $region20: #{transformer_decoder_forward.1} parent=11 // pred_fallthru
          _
        // Predicated region
        $region21: #{transformer_decoder_forward.1} parent=11 // pred_check
          %p538 = pneg %p105
        $region22: #{transformer_decoder_forward.1} parent=11 // pred_check_branch
          %540 = sbr.rel (%p538) target = $region24
        $region23: #{transformer_decoder_forward.1} parent=11 // pred_region
          _
        $region24: #{transformer_decoder_forward.1} parent=11 // pred_fallthru
          _
        // Predicated region
        $region25: #{transformer_decoder_forward.1} parent=11 // pred_check
          %p541 = pneg %p464
        $region26: #{transformer_decoder_forward.1} parent=11 // pred_check_branch
          %543 = sbr.rel (%p541) target = $region28
        $region27: #{transformer_decoder_forward.1} parent=11 // pred_region
          _
        $region28: #{transformer_decoder_forward.1} parent=11 // pred_fallthru
          _
        // Predicated region
        $region29: #{transformer_decoder_forward.1} parent=11 // pred_check
          %p544 = pneg %p485
        $region30: #{transformer_decoder_forward.1} parent=11 // pred_check_branch
          %546 = sbr.rel (%p544) target = $region32
        $region31: #{transformer_decoder_forward.1} parent=11 // pred_region
          _
        $region32: #{transformer_decoder_forward.1} parent=11 // pred_fallthru
          _
      $region12: #{transformer_decoder_forward.1} parent=5 // pred_fallthru
        _
      %p547 = scmp.lt.s32.totalorder %s25, 2
      // Predicated region
      $region33: #{transformer_decoder_forward.1} parent=5 // pred_check
        %p548 = pneg %p547
      $region34: #{transformer_decoder_forward.1} parent=5 // pred_check_branch
        %550 = sbr.rel (%p548) target = $region36
      $region35: #{transformer_decoder_forward.1} parent=5 // pred_region
        // Predicated region
        $region37: #{transformer_decoder_forward.1} parent=35 // pred_check
          %p551 = pneg %p125
        $region38: #{transformer_decoder_forward.1} parent=35 // pred_check_branch
          %553 = sbr.rel (%p551) target = $region40
        $region39: #{transformer_decoder_forward.1} parent=35 // pred_region
          %p554 = scmp.lt.s32.totalorder %s33, 1
          %s555 = scalar_select %p554, %s33, 1
          %s556 = smul.addr %s555, 4
          %s557 = smul.addr %s556, 8
          %s558 = scalar_lea.vmem %s3, %s557
        $region40: #{transformer_decoder_forward.1} parent=35 // pred_fallthru
          _
        // Predicated region
        $region41: #{transformer_decoder_forward.1} parent=35 // pred_check
          %p559 = pneg %p151
        $region42: #{transformer_decoder_forward.1} parent=35 // pred_check_branch
          %561 = sbr.rel (%p559) target = $region44
        $region43: #{transformer_decoder_forward.1} parent=35 // pred_region
          %p562 = scmp.lt.s32.totalorder %s33, 1
          %s563 = scalar_select %p562, %s33, 1
          %s564 = smul.addr %s563, 4
          %s565 = smul.addr %s564, 8
          %s566 = scalar_lea.vmem %s4, %s565
        $region44: #{transformer_decoder_forward.1} parent=35 // pred_fallthru
          _
        // Predicated region
        $region45: #{transformer_decoder_forward.1} parent=35 // pred_check
          %p567 = pneg %p177
        $region46: #{transformer_decoder_forward.1} parent=35 // pred_check_branch
          %569 = sbr.rel (%p567) target = $region48
        $region47: #{transformer_decoder_forward.1} parent=35 // pred_region
          %p570 = scmp.lt.s32.totalorder %s33, 1
          %s571 = scalar_select %p570, %s33, 1
          %s572 = smul.addr %s571, 4
          %s573 = smul.addr %s572, 8
          %s574 = scalar_lea.vmem %s5, %s573
        $region48: #{transformer_decoder_forward.1} parent=35 // pred_fallthru
          _
        // Predicated region
        $region49: #{transformer_decoder_forward.1} parent=35 // pred_check
          %p575 = pneg %p203
        $region50: #{transformer_decoder_forward.1} parent=35 // pred_check_branch
          %577 = sbr.rel (%p575) target = $region52
        $region51: #{transformer_decoder_forward.1} parent=35 // pred_region
          %p578 = scmp.lt.s32.totalorder %s33, 1
          %s579 = scalar_select %p578, %s33, 1
          %s580 = smul.addr %s579, 16
          %s581 = smul.addr %s580, 8
          %s582 = scalar_lea.vmem %s6, %s581
        $region52: #{transformer_decoder_forward.1} parent=35 // pred_fallthru
          _
        // Predicated region
        $region53: #{transformer_decoder_forward.1} parent=35 // pred_check
          %p583 = pneg %p229
        $region54: #{transformer_decoder_forward.1} parent=35 // pred_check_branch
          %585 = sbr.rel (%p583) target = $region56
        $region55: #{transformer_decoder_forward.1} parent=35 // pred_region
          %p586 = scmp.lt.s32.totalorder %s33, 1
          %s587 = scalar_select %p586, %s33, 1
          %s588 = scalar_lea.vmem %s7, %s587
        $region56: #{transformer_decoder_forward.1} parent=35 // pred_fallthru
          _
        // Predicated region
        $region57: #{transformer_decoder_forward.1} parent=35 // pred_check
          %p589 = pneg %p255
        $region58: #{transformer_decoder_forward.1} parent=35 // pred_check_branch
          %591 = sbr.rel (%p589) target = $region60
        $region59: #{transformer_decoder_forward.1} parent=35 // pred_region
          %p592 = scmp.lt.s32.totalorder %s33, 1
          %s593 = scalar_select %p592, %s33, 1
          %s594 = scalar_lea.vmem %s8, %s593
        $region60: #{transformer_decoder_forward.1} parent=35 // pred_fallthru
          _
        // Predicated region
        $region61: #{transformer_decoder_forward.1} parent=35 // pred_check
          %p595 = pneg %p281
        $region62: #{transformer_decoder_forward.1} parent=35 // pred_check_branch
          %597 = sbr.rel (%p595) target = $region64
        $region63: #{transformer_decoder_forward.1} parent=35 // pred_region
          %p598 = scmp.lt.s32.totalorder %s33, 1
          %s599 = scalar_select %p598, %s33, 1
          %s600 = scalar_lea.vmem %s9, %s599
        $region64: #{transformer_decoder_forward.1} parent=35 // pred_fallthru
          _
        // Predicated region
        $region65: #{transformer_decoder_forward.1} parent=35 // pred_check
          %p601 = pneg %p307
        $region66: #{transformer_decoder_forward.1} parent=35 // pred_check_branch
          %603 = sbr.rel (%p601) target = $region68
        $region67: #{transformer_decoder_forward.1} parent=35 // pred_region
          %p604 = scmp.lt.s32.totalorder %s33, 1
          %s605 = scalar_select %p604, %s33, 1
          %s606 = smul.addr %s605, 4
          %s607 = smul.addr %s606, 8
          %s608 = scalar_lea.vmem %s10, %s607
        $region68: #{transformer_decoder_forward.1} parent=35 // pred_fallthru
          _
        // Predicated region
        $region69: #{transformer_decoder_forward.1} parent=35 // pred_check
          %p609 = pneg %p333
        $region70: #{transformer_decoder_forward.1} parent=35 // pred_check_branch
          %611 = sbr.rel (%p609) target = $region72
        $region71: #{transformer_decoder_forward.1} parent=35 // pred_region
          %p612 = scmp.lt.s32.totalorder %s33, 1
          %s613 = scalar_select %p612, %s33, 1
          %s614 = scalar_lea.vmem %s11, %s613
        $region72: #{transformer_decoder_forward.1} parent=35 // pred_fallthru
          _
        // Predicated region
        $region73: #{transformer_decoder_forward.1} parent=35 // pred_check
          %p615 = pneg %p359
        $region74: #{transformer_decoder_forward.1} parent=35 // pred_check_branch
          %617 = sbr.rel (%p615) target = $region76
        $region75: #{transformer_decoder_forward.1} parent=35 // pred_region
          %p618 = scmp.lt.s32.totalorder %s33, 1
          %s619 = scalar_select %p618, %s33, 1
          %s620 = smul.addr %s619, 16
          %s621 = smul.addr %s620, 8
          %s622 = scalar_lea.vmem %s12, %s621
        $region76: #{transformer_decoder_forward.1} parent=35 // pred_fallthru
          _
        // Predicated region
        $region77: #{transformer_decoder_forward.1} parent=35 // pred_check
          %p623 = pneg %p385
        $region78: #{transformer_decoder_forward.1} parent=35 // pred_check_branch
          %625 = sbr.rel (%p623) target = $region80
        $region79: #{transformer_decoder_forward.1} parent=35 // pred_region
          %p626 = scmp.lt.s32.totalorder %s33, 1
          %s627 = scalar_select %p626, %s33, 1
          %s628 = scalar_lea.vmem %s13, %s627
        $region80: #{transformer_decoder_forward.1} parent=35 // pred_fallthru
          _
        // Predicated region
        $region81: #{transformer_decoder_forward.1} parent=35 // pred_check
          %p629 = pneg %p411
        $region82: #{transformer_decoder_forward.1} parent=35 // pred_check_branch
          %631 = sbr.rel (%p629) target = $region84
        $region83: #{transformer_decoder_forward.1} parent=35 // pred_region
          %p632 = scmp.lt.s32.totalorder %s33, 1
          %s633 = scalar_select %p632, %s33, 1
          %s634 = scalar_lea.vmem %s14, %s633
        $region84: #{transformer_decoder_forward.1} parent=35 // pred_fallthru
          _
        // Predicated region
        $region85: #{transformer_decoder_forward.1} parent=35 // pred_check
          %p635 = pneg %p437
        $region86: #{transformer_decoder_forward.1} parent=35 // pred_check_branch
          %637 = sbr.rel (%p635) target = $region88
        $region87: #{transformer_decoder_forward.1} parent=35 // pred_region
          %p638 = scmp.lt.s32.totalorder %s33, 1
          %s639 = scalar_select %p638, %s33, 1
          %s640 = scalar_lea.vmem %s15, %s639
        $region88: #{transformer_decoder_forward.1} parent=35 // pred_fallthru
          _
      $region36: #{transformer_decoder_forward.1} parent=5 // pred_fallthru
        _
      %p641 = scmp.le.s32.totalorder 1, %s25
      %p642 = scmp.lt.s32.totalorder %s25, 3
      %p643 = pnand %p641, %p642
      %p644 = pneg %p643
      // Predicated region
      $region89: #{transformer_decoder_forward.1} parent=5 // pred_check
        _
      $region90: #{transformer_decoder_forward.1} parent=5 // pred_check_branch
        %646 = sbr.rel (%p643) target = $region92
      $region91: #{transformer_decoder_forward.1} parent=5 // pred_region
        %s647 = ssub.s32 %s25, 1
        %s648 = smul.u32 2, %s34
        %p649 = scmp.lt.s32.totalorder %s648, 1
        %s650 = scalar_select %p649, %s648, 1
        %s651 = smul.addr %s650, 8
        %s652 = scalar_lea.vmem %s0, %s651
        %p653 = pneg %p63
        %p654 = pneg %p60
        %p655 = pneg %p84
        %p656 = pneg %p81
        %p657 = pneg %p105
        %p658 = pneg %p102
        %p659 = scmp.lt.s32.totalorder %s35, 1
        %s660 = scalar_select %p659, %s35, 1
        %s661 = smul.addr %s660, 4
        %s662 = smul.addr %s661, 8
        %s663 = scalar_lea.vmem %s3, %s662
        %p664 = pneg %p131
        %p665 = pneg %p128
        %p666 = scmp.lt.s32.totalorder %s35, 1
        %s667 = scalar_select %p666, %s35, 1
        %s668 = smul.addr %s667, 4
        %s669 = smul.addr %s668, 8
        %s670 = scalar_lea.vmem %s4, %s669
        %p671 = pneg %p157
        %p672 = pneg %p154
        %p673 = scmp.lt.s32.totalorder %s35, 1
        %s674 = scalar_select %p673, %s35, 1
        %s675 = smul.addr %s674, 4
        %s676 = smul.addr %s675, 8
        %s677 = scalar_lea.vmem %s5, %s676
        %p678 = pneg %p183
        %p679 = pneg %p180
        %p680 = scmp.lt.s32.totalorder %s35, 1
        %s681 = scalar_select %p680, %s35, 1
        %s682 = smul.addr %s681, 16
        %s683 = smul.addr %s682, 8
        %s684 = scalar_lea.vmem %s6, %s683
        %p685 = pneg %p209
        %p686 = pneg %p206
        %p687 = scmp.lt.s32.totalorder %s35, 1
        %s688 = scalar_select %p687, %s35, 1
        %s689 = scalar_lea.vmem %s7, %s688
        %p690 = pneg %p235
        %p691 = pneg %p232
        %p692 = scmp.lt.s32.totalorder %s35, 1
        %s693 = scalar_select %p692, %s35, 1
        %s694 = scalar_lea.vmem %s8, %s693
        %p695 = pneg %p261
        %p696 = pneg %p258
        %p697 = scmp.lt.s32.totalorder %s35, 1
        %s698 = scalar_select %p697, %s35, 1
        %s699 = scalar_lea.vmem %s9, %s698
        %p700 = pneg %p287
        %p701 = pneg %p284
        %p702 = scmp.lt.s32.totalorder %s35, 1
        %s703 = scalar_select %p702, %s35, 1
        %s704 = smul.addr %s703, 4
        %s705 = smul.addr %s704, 8
        %s706 = scalar_lea.vmem %s10, %s705
        %p707 = pneg %p313
        %p708 = pneg %p310
        %p709 = scmp.lt.s32.totalorder %s35, 1
        %s710 = scalar_select %p709, %s35, 1
        %s711 = scalar_lea.vmem %s11, %s710
        %p712 = pneg %p339
        %p713 = pneg %p336
        %p714 = scmp.lt.s32.totalorder %s35, 1
        %s715 = scalar_select %p714, %s35, 1
        %s716 = smul.addr %s715, 16
        %s717 = smul.addr %s716, 8
        %s718 = scalar_lea.vmem %s12, %s717
        %p719 = pneg %p365
        %p720 = pneg %p362
        %p721 = scmp.lt.s32.totalorder %s35, 1
        %s722 = scalar_select %p721, %s35, 1
        %s723 = scalar_lea.vmem %s13, %s722
        %p724 = pneg %p391
        %p725 = pneg %p388
        %p726 = scmp.lt.s32.totalorder %s35, 1
        %s727 = scalar_select %p726, %s35, 1
        %s728 = scalar_lea.vmem %s14, %s727
        %p729 = pneg %p417
        %p730 = pneg %p414
        %p731 = scmp.lt.s32.totalorder %s35, 1
        %s732 = scalar_select %p731, %s35, 1
        %s733 = scalar_lea.vmem %s15, %s732
        %p734 = pneg %p443
        %p735 = pneg %p440
        %p736 = pneg %p464
        %p737 = pneg %p461
        %p738 = pneg %p485
        %p739 = pneg %p482
        %p740 = pneg %p511
        %p741 = pneg %p508
        %s742 = smul.u32 2, %s34
        %p743 = scmp.lt.s32.totalorder %s742, 1
        %s744 = scalar_select %p743, %s742, 1
        %s745 = smul.addr %s744, 8
        %s746 = scalar_lea.vmem %s0, %s745
        %s747 = smul.u32 2, %s34
        %p748 = scmp.lt.s32.totalorder %s35, 1
        %s749 = scalar_select %p748, %s35, 1
        %s750 = smul.addr %s749, 4
        %s751 = smul.addr %s750, 8
        %s752 = scalar_lea.vmem %s3, %s751
        %p753 = scmp.lt.s32.totalorder %s35, 1
        %s754 = scalar_select %p753, %s35, 1
        %s755 = smul.addr %s754, 4
        %s756 = smul.addr %s755, 8
        %s757 = scalar_lea.vmem %s4, %s756
        %p758 = scmp.lt.s32.totalorder %s35, 1
        %s759 = scalar_select %p758, %s35, 1
        %s760 = smul.addr %s759, 4
        %s761 = smul.addr %s760, 8
        %s762 = scalar_lea.vmem %s5, %s761
        %p763 = scmp.lt.s32.totalorder %s35, 1
        %s764 = scalar_select %p763, %s35, 1
        %s765 = smul.addr %s764, 16
        %s766 = smul.addr %s765, 8
        %s767 = scalar_lea.vmem %s6, %s766
        %p768 = scmp.lt.s32.totalorder %s35, 1
        %s769 = scalar_select %p768, %s35, 1
        %s770 = scalar_lea.vmem %s7, %s769
        %p771 = scmp.lt.s32.totalorder %s35, 1
        %s772 = scalar_select %p771, %s35, 1
        %s773 = scalar_lea.vmem %s8, %s772
        %p774 = scmp.lt.s32.totalorder %s35, 1
        %s775 = scalar_select %p774, %s35, 1
        %s776 = scalar_lea.vmem %s9, %s775
        %p777 = scmp.lt.s32.totalorder %s35, 1
        %s778 = scalar_select %p777, %s35, 1
        %s779 = smul.addr %s778, 4
        %s780 = smul.addr %s779, 8
        %s781 = scalar_lea.vmem %s10, %s780
        %p782 = scmp.lt.s32.totalorder %s35, 1
        %s783 = scalar_select %p782, %s35, 1
        %s784 = scalar_lea.vmem %s11, %s783
        %p785 = scmp.lt.s32.totalorder %s35, 1
        %s786 = scalar_select %p785, %s35, 1
        %s787 = smul.addr %s786, 16
        %s788 = smul.addr %s787, 8
        %s789 = scalar_lea.vmem %s12, %s788
        %p790 = scmp.lt.s32.totalorder %s35, 1
        %s791 = scalar_select %p790, %s35, 1
        %s792 = scalar_lea.vmem %s13, %s791
        %p793 = scmp.lt.s32.totalorder %s35, 1
        %s794 = scalar_select %p793, %s35, 1
        %s795 = scalar_lea.vmem %s14, %s794
        %p796 = scmp.lt.s32.totalorder %s35, 1
        %s797 = scalar_select %p796, %s35, 1
        %s798 = scalar_lea.vmem %s15, %s797
        %p799 = scmp.eq.s32.totalorder %s35, 0
        // Predicated region
        $region93: #{transformer_decoder_forward.1} parent=91 // pred_check
          %p800 = pneg %p799
        $region94: #{transformer_decoder_forward.1} parent=91 // pred_check_branch
          %802 = sbr.rel (%p800) target = $region96
        $region95: #{transformer_decoder_forward.1} parent=91 // pred_region
          %v803 = vld [vmem:[%s746] sm:$0xff]
          %v804 = vld [vmem:[%s746 + $0x8] sm:$0xff]
          %vm805 = vcmask 261120
          %806 = vst.msk [vmem:[#allocation2] sm:$0xff] %vm805, %v803
          %807 = vst.msk [vmem:[#allocation2 + $0x8] sm:$0xff] %vm805, %v804
        $region96: #{transformer_decoder_forward.1} parent=91 // pred_fallthru
          _
        %v808 = vld [vmem:[#allocation2] sm:$0xff]
        %v809 = vld [vmem:[#allocation2 + $0x8] sm:$0xff]
        %v810 = vld [vmem:[%s752] sm:$0xff]
        %v811 = vld [vmem:[%s752 + $0x8] sm:$0xff]
        %v812 = vld [vmem:[%s752 + $0x10] sm:$0xff]
        %v813 = vld [vmem:[%s752 + $0x18] sm:$0xff]
        %vm814 = vcmask 261120
        %v816 = vsel %vm814, %v808, 0
        %v819 = vsel %vm814, %v809, 0
        %821 = vmatpush.msra.mxu0 0.0
        %822 = vmatpush.msra.mxu0 0.0
        %823 = vmatpush.msra.mxu0 0.0
        %824 = vmatpush.msra.mxu0 0.0
        %825 = vmatpush.msra.mxu0 0.0
        %826 = vmatpush.msra.mxu0 0.0
        %827 = vmatpush.msra.mxu0 0.0
        %828 = vmatpush.msra.mxu0 0.0
        %829 = vmatpush.msra.mxu0 0.0
        %830 = vmatpush.msra.mxu0 0.0
        %831 = vmatpush.msra.mxu0 0.0
        %832 = vmatpush.msra.mxu0 0.0
        %833 = vmatpush.msra.mxu0 %v813
        %834 = vmatpush.msra.mxu0 %v812
        %835 = vmatpush.msra.mxu0 %v811
        %836 = vmatpush.msra.mxu0 %v810
        %837 = vmatmul.f32.gmra.mxu0 %v816
        %v838 = vpop.f32.mrf.mxu0
        %v839 = vadd.f32 0.0, %v838
        %840 = vmatmul.f32.gmra.mxu0 %v819
        %v841 = vpop.f32.mrf.mxu0
        %v842 = vadd.f32 0.0, %v841
        %843 = vdwg.mxu0
        %v844 = vld [vmem:[%s757] sm:$0xff]
        %v845 = vld [vmem:[%s757 + $0x8] sm:$0xff]
        %v846 = vld [vmem:[%s757 + $0x10] sm:$0xff]
        %v847 = vld [vmem:[%s757 + $0x18] sm:$0xff]
        %848 = vmatpush.msra.mxu0 0.0
        %849 = vmatpush.msra.mxu0 0.0
        %850 = vmatpush.msra.mxu0 0.0
        %851 = vmatpush.msra.mxu0 0.0
        %852 = vmatpush.msra.mxu0 0.0
        %853 = vmatpush.msra.mxu0 0.0
        %854 = vmatpush.msra.mxu0 0.0
        %855 = vmatpush.msra.mxu0 0.0
        %856 = vmatpush.msra.mxu0 0.0
        %857 = vmatpush.msra.mxu0 0.0
        %858 = vmatpush.msra.mxu0 0.0
        %859 = vmatpush.msra.mxu0 0.0
        %860 = vmatpush.msra.mxu0 %v847
        %861 = vmatpush.msra.mxu0 %v846
        %862 = vmatpush.msra.mxu0 %v845
        %863 = vmatpush.msra.mxu0 %v844
        %864 = vmatmul.f32.gmra.mxu0 %v816
        %v865 = vpop.f32.mrf.mxu0
        %v866 = vadd.f32 0.0, %v865
        %867 = vmatmul.f32.gmra.mxu0 %v819
        %v868 = vpop.f32.mrf.mxu0
        %v869 = vadd.f32 0.0, %v868
        %870 = vdwg.mxu0
        %v871 = vld [vmem:[%s762] sm:$0xff]
        %v872 = vld [vmem:[%s762 + $0x8] sm:$0xff]
        %v873 = vld [vmem:[%s762 + $0x10] sm:$0xff]
        %v874 = vld [vmem:[%s762 + $0x18] sm:$0xff]
        %875 = vmatpush.msra.mxu0 0.0
        %876 = vmatpush.msra.mxu0 0.0
        %877 = vmatpush.msra.mxu0 0.0
        %878 = vmatpush.msra.mxu0 0.0
        %879 = vmatpush.msra.mxu0 0.0
        %880 = vmatpush.msra.mxu0 0.0
        %881 = vmatpush.msra.mxu0 0.0
        %882 = vmatpush.msra.mxu0 0.0
        %883 = vmatpush.msra.mxu0 0.0
        %884 = vmatpush.msra.mxu0 0.0
        %885 = vmatpush.msra.mxu0 0.0
        %886 = vmatpush.msra.mxu0 0.0
        %887 = vmatpush.msra.mxu0 %v874
        %888 = vmatpush.msra.mxu0 %v873
        %889 = vmatpush.msra.mxu0 %v872
        %890 = vmatpush.msra.mxu0 %v871
        %891 = vmatmul.f32.gmra.mxu0 %v816
        %v892 = vpop.f32.mrf.mxu0
        %v893 = vadd.f32 0.0, %v892
        %894 = vmatmul.f32.gmra.mxu0 %v819
        %v895 = vpop.f32.mrf.mxu0
        %v896 = vadd.f32 0.0, %v895
        %897 = vdwg.mxu0
        %v898 = vld [vmem:[%s1] sm:$0xff]
        %v899 = vld [vmem:[%s1 + $0x8] sm:$0xff]
        %v901 = vsel %vm814, %v839, 0
        %v904 = vsel %vm814, %v842, 0
        %v907 = vsel %vm814, %v866, 0
        %v910 = vsel %vm814, %v869, 0
        %912 = vmatpush.xpose.msra.mxu0 0.0
        %913 = vmatpush.xpose.msra.mxu0 0.0
        %914 = vmatpush.xpose.msra.mxu0 0.0
        %915 = vmatpush.xpose.msra.mxu0 0.0
        %916 = vmatpush.xpose.msra.mxu0 0.0
        %917 = vmatpush.xpose.msra.mxu0 0.0
        %918 = vmatpush.xpose.msra.mxu0 0.0
        %919 = vmatpush.xpose.msra.mxu0 0.0
        %920 = vmatpush.xpose.msra.mxu0 0.0
        %921 = vmatpush.xpose.msra.mxu0 0.0
        %922 = vmatpush.xpose.msra.mxu0 0.0
        %923 = vmatpush.xpose.msra.mxu0 0.0
        %924 = vmatpush.xpose.msra.mxu0 0.0
        %925 = vmatpush.xpose.msra.mxu0 0.0
        %926 = vmatpush.xpose.msra.mxu0 %v910
        %927 = vmatpush.xpose.msra.mxu0 %v907
        %928 = vmatmul.f32.gmra.mxu0 %v901
        %v929 = vpop.f32.mrf.mxu0
        %v930 = vadd.f32 0.0, %v929
        %931 = vmatmul.f32.gmra.mxu0 %v904
        %v932 = vpop.f32.mrf.mxu0
        %v933 = vadd.f32 0.0, %v932
        %934 = vdwg.mxu0
        %v935 = vmul.f32 %v930, 0.17677669
        %v936 = vmul.f32 %v933, 0.17677669
        %v937 = vadd.f32 %v935, %v898
        %v938 = vadd.f32 %v936, %v899
        %vm939 = vcmask 130048
        %v940 = vsel %vm939, %v937, -inf
        %941 = vmax.xlane.f32.xlu0 %v940
        %v942 = vpop.xlane.xlu0 %941
        %v943 = vsel %vm939, %v938, -inf
        %944 = vmax.xlane.f32.xlu0 %v943
        %v945 = vpop.xlane.xlu0 %944
        %v946 = vsub.f32 %v937, %v942
        %v947 = vsub.f32 %v938, %v945
        %v948 = vmul.f32 %v946, 1.442695
        %v949 = vpow.pop %v948
        %v950 = vmul.f32 %v947, 1.442695
        %v951 = vpow.pop %v950
        %v952 = vsel %vm939, %v949, 0.0
        %953 = vadd.xlane.f32.xlu0 %v952
        %v954 = vpop.xlane.xlu0 %953
        %v955 = vsel %vm939, %v951, 0.0
        %956 = vadd.xlane.f32.xlu0 %v955
        %v957 = vpop.xlane.xlu0 %956
        %v958 = vrcp.pop %v954
        %v959 = vmul.f32 %v954, %v958
        %v960 = vsub.f32 1.0, %v959
        %v961 = vmul.f32 %v958, %v960
        %v962 = vadd.f32 %v958, %v961
        %vm963 = vweird.f32 %v954
        %vm964 = vweird.f32 %v958
        %vm965 = vmor %vm963, %vm964
        %v966 = vsel %vm965, %v958, %v962
        %v967 = vand.u32 2147483647, %v954
        %vm968 = vcmp.eq.f32.partialorder %v967, 8.507059e+37
        %v969 = vand.u32 %v954, 2147483648
        %v970 = vor.u32 1.1754944e-38, %v969
        %v971 = vsel %vm968, %v970, %v966
        %v972 = vmul.f32 %v949, %v971
        %v973 = vrcp.pop %v957
        %v974 = vmul.f32 %v957, %v973
        %v975 = vsub.f32 1.0, %v974
        %v976 = vmul.f32 %v973, %v975
        %v977 = vadd.f32 %v973, %v976
        %vm978 = vweird.f32 %v957
        %vm979 = vweird.f32 %v973
        %vm980 = vmor %vm978, %vm979
        %v981 = vsel %vm980, %v973, %v977
        %v982 = vand.u32 2147483647, %v957
        %vm983 = vcmp.eq.f32.partialorder %v982, 8.507059e+37
        %v984 = vand.u32 %v957, 2147483648
        %v985 = vor.u32 1.1754944e-38, %v984
        %v986 = vsel %vm983, %v985, %v981
        %v987 = vmul.f32 %v951, %v986
        %v989 = vsel %vm939, %v972, 0
        %v992 = vsel %vm939, %v987, 0
        %994 = vmatpush.msra.mxu0 0.0
        %995 = vmatpush.msra.mxu0 0.0
        %996 = vmatpush.msra.mxu0 0.0
        %997 = vmatpush.msra.mxu0 0.0
        %998 = vmatpush.msra.mxu0 0.0
        %999 = vmatpush.msra.mxu0 0.0
        %1000 = vmatpush.msra.mxu0 0.0
        %1001 = vmatpush.msra.mxu0 0.0
        %1002 = vmatpush.msra.mxu0 0.0
        %1003 = vmatpush.msra.mxu0 0.0
        %1004 = vmatpush.msra.mxu0 0.0
        %1005 = vmatpush.msra.mxu0 0.0
        %1006 = vmatpush.msra.mxu0 0.0
        %1007 = vmatpush.msra.mxu0 0.0
        %1008 = vmatpush.msra.mxu0 %v896
        %1009 = vmatpush.msra.mxu0 %v893
        %1010 = vmatmul.f32.gmra.mxu0 %v989
        %v1011 = vpop.f32.mrf.mxu0
        %v1012 = vadd.f32 0.0, %v1011
        %1013 = vmatmul.f32.gmra.mxu0 %v992
        %v1014 = vpop.f32.mrf.mxu0
        %v1015 = vadd.f32 0.0, %v1014
        %1016 = vdwg.mxu0
        %1017 = vrot.lane.b32.xlu0 %v839, 96
        %v1018 = vpop.permute.xlu0 %1017
        %1019 = vrot.lane.b32.xlu0 %v842, 96
        %v1020 = vpop.permute.xlu0 %1019
        %1021 = vrot.lane.b32.xlu0 %v866, 96
        %v1022 = vpop.permute.xlu0 %1021
        %1023 = vrot.lane.b32.xlu0 %v869, 96
        %v1024 = vpop.permute.xlu0 %1023
        %v1025 = vsel %vm814, %v1018, 0
        %v1027 = vsel %vm814, %v1020, 0
        %v1029 = vsel %vm814, %v1022, 0
        %v1031 = vsel %vm814, %v1024, 0
        %1033 = vmatpush.xpose.msra.mxu0 0.0
        %1034 = vmatpush.xpose.msra.mxu0 0.0
        %1035 = vmatpush.xpose.msra.mxu0 0.0
        %1036 = vmatpush.xpose.msra.mxu0 0.0
        %1037 = vmatpush.xpose.msra.mxu0 0.0
        %1038 = vmatpush.xpose.msra.mxu0 0.0
        %1039 = vmatpush.xpose.msra.mxu0 0.0
        %1040 = vmatpush.xpose.msra.mxu0 0.0
        %1041 = vmatpush.xpose.msra.mxu0 0.0
        %1042 = vmatpush.xpose.msra.mxu0 0.0
        %1043 = vmatpush.xpose.msra.mxu0 0.0
        %1044 = vmatpush.xpose.msra.mxu0 0.0
        %1045 = vmatpush.xpose.msra.mxu0 0.0
        %1046 = vmatpush.xpose.msra.mxu0 0.0
        %1047 = vmatpush.xpose.msra.mxu0 %v1031
        %1048 = vmatpush.xpose.msra.mxu0 %v1029
        %1049 = vmatmul.f32.gmra.mxu0 %v1025
        %v1050 = vpop.f32.mrf.mxu0
        %v1051 = vadd.f32 0.0, %v1050
        %1052 = vmatmul.f32.gmra.mxu0 %v1027
        %v1053 = vpop.f32.mrf.mxu0
        %v1054 = vadd.f32 0.0, %v1053
        %1055 = vdwg.mxu0
        %v1056 = vmul.f32 %v1051, 0.17677669
        %v1057 = vmul.f32 %v1054, 0.17677669
        %v1058 = vadd.f32 %v1056, %v898
        %v1059 = vadd.f32 %v1057, %v899
        %v1060 = vsel %vm939, %v1058, -inf
        %1061 = vmax.xlane.f32.xlu0 %v1060
        %v1062 = vpop.xlane.xlu0 %1061
        %v1063 = vsel %vm939, %v1059, -inf
        %1064 = vmax.xlane.f32.xlu0 %v1063
        %v1065 = vpop.xlane.xlu0 %1064
        %v1066 = vsub.f32 %v1058, %v1062
        %v1067 = vsub.f32 %v1059, %v1065
        %v1068 = vmul.f32 %v1066, 1.442695
        %v1069 = vpow.pop %v1068
        %v1070 = vmul.f32 %v1067, 1.442695
        %v1071 = vpow.pop %v1070
        %v1072 = vsel %vm939, %v1069, 0.0
        %1073 = vadd.xlane.f32.xlu0 %v1072
        %v1074 = vpop.xlane.xlu0 %1073
        %v1075 = vsel %vm939, %v1071, 0.0
        %1076 = vadd.xlane.f32.xlu0 %v1075
        %v1077 = vpop.xlane.xlu0 %1076
        %v1078 = vrcp.pop %v1074
        %v1079 = vmul.f32 %v1074, %v1078
        %v1080 = vsub.f32 1.0, %v1079
        %v1081 = vmul.f32 %v1078, %v1080
        %v1082 = vadd.f32 %v1078, %v1081
        %vm1083 = vweird.f32 %v1074
        %vm1084 = vweird.f32 %v1078
        %vm1085 = vmor %vm1083, %vm1084
        %v1086 = vsel %vm1085, %v1078, %v1082
        %v1087 = vand.u32 2147483647, %v1074
        %vm1088 = vcmp.eq.f32.partialorder %v1087, 8.507059e+37
        %v1089 = vand.u32 %v1074, 2147483648
        %v1090 = vor.u32 1.1754944e-38, %v1089
        %v1091 = vsel %vm1088, %v1090, %v1086
        %v1092 = vmul.f32 %v1069, %v1091
        %v1093 = vrcp.pop %v1077
        %v1094 = vmul.f32 %v1077, %v1093
        %v1095 = vsub.f32 1.0, %v1094
        %v1096 = vmul.f32 %v1093, %v1095
        %v1097 = vadd.f32 %v1093, %v1096
        %vm1098 = vweird.f32 %v1077
        %vm1099 = vweird.f32 %v1093
        %vm1100 = vmor %vm1098, %vm1099
        %v1101 = vsel %vm1100, %v1093, %v1097
        %v1102 = vand.u32 2147483647, %v1077
        %vm1103 = vcmp.eq.f32.partialorder %v1102, 8.507059e+37
        %v1104 = vand.u32 %v1077, 2147483648
        %v1105 = vor.u32 1.1754944e-38, %v1104
        %v1106 = vsel %vm1103, %v1105, %v1101
        %v1107 = vmul.f32 %v1071, %v1106
        %1110 = vrot.lane.b32.xlu0 %v893, 96
        %v1111 = vpop.permute.xlu0 %1110
        %1112 = vrot.lane.b32.xlu0 %v896, 96
        %v1113 = vpop.permute.xlu0 %1112
        %v1117 = vsel %vm939, %v1092, 0
        %v1120 = vsel %vm939, %v1107, 0
        %1122 = vmatpush.msra.mxu0 0.0
        %1123 = vmatpush.msra.mxu0 0.0
        %1124 = vmatpush.msra.mxu0 0.0
        %1125 = vmatpush.msra.mxu0 0.0
        %1126 = vmatpush.msra.mxu0 0.0
        %1127 = vmatpush.msra.mxu0 0.0
        %1128 = vmatpush.msra.mxu0 0.0
        %1129 = vmatpush.msra.mxu0 0.0
        %1130 = vmatpush.msra.mxu0 0.0
        %1131 = vmatpush.msra.mxu0 0.0
        %1132 = vmatpush.msra.mxu0 0.0
        %1133 = vmatpush.msra.mxu0 0.0
        %1134 = vmatpush.msra.mxu0 0.0
        %1135 = vmatpush.msra.mxu0 0.0
        %1136 = vmatpush.msra.mxu0 %v1113
        %1137 = vmatpush.msra.mxu0 %v1111
        %1138 = vmatmul.f32.gmra.mxu0 %v1117
        %v1139 = vpop.f32.mrf.mxu0
        %v1140 = vadd.f32 0.0, %v1139
        %1141 = vmatmul.f32.gmra.mxu0 %v1120
        %v1142 = vpop.f32.mrf.mxu0
        %v1143 = vadd.f32 0.0, %v1142
        %1144 = vdwg.mxu0
        %1145 = vrot.lane.b32.xlu0 %v839, 64
        %v1146 = vpop.permute.xlu0 %1145
        %1147 = vrot.lane.b32.xlu0 %v842, 64
        %v1148 = vpop.permute.xlu0 %1147
        %1149 = vrot.lane.b32.xlu0 %v866, 64
        %v1150 = vpop.permute.xlu0 %1149
        %1151 = vrot.lane.b32.xlu0 %v869, 64
        %v1152 = vpop.permute.xlu0 %1151
        %v1153 = vsel %vm814, %v1146, 0
        %v1155 = vsel %vm814, %v1148, 0
        %v1157 = vsel %vm814, %v1150, 0
        %v1159 = vsel %vm814, %v1152, 0
        %1161 = vmatpush.xpose.msra.mxu0 0.0
        %1162 = vmatpush.xpose.msra.mxu0 0.0
        %1163 = vmatpush.xpose.msra.mxu0 0.0
        %1164 = vmatpush.xpose.msra.mxu0 0.0
        %1165 = vmatpush.xpose.msra.mxu0 0.0
        %1166 = vmatpush.xpose.msra.mxu0 0.0
        %1167 = vmatpush.xpose.msra.mxu0 0.0
        %1168 = vmatpush.xpose.msra.mxu0 0.0
        %1169 = vmatpush.xpose.msra.mxu0 0.0
        %1170 = vmatpush.xpose.msra.mxu0 0.0
        %1171 = vmatpush.xpose.msra.mxu0 0.0
        %1172 = vmatpush.xpose.msra.mxu0 0.0
        %1173 = vmatpush.xpose.msra.mxu0 0.0
        %1174 = vmatpush.xpose.msra.mxu0 0.0
        %1175 = vmatpush.xpose.msra.mxu0 %v1159
        %1176 = vmatpush.xpose.msra.mxu0 %v1157
        %1177 = vmatmul.f32.gmra.mxu0 %v1153
        %v1178 = vpop.f32.mrf.mxu0
        %v1179 = vadd.f32 0.0, %v1178
        %1180 = vmatmul.f32.gmra.mxu0 %v1155
        %v1181 = vpop.f32.mrf.mxu0
        %v1182 = vadd.f32 0.0, %v1181
        %1183 = vdwg.mxu0
        %v1184 = vmul.f32 %v1179, 0.17677669
        %v1185 = vmul.f32 %v1182, 0.17677669
        %v1186 = vadd.f32 %v1184, %v898
        %v1187 = vadd.f32 %v1185, %v899
        %v1188 = vsel %vm939, %v1186, -inf
        %1189 = vmax.xlane.f32.xlu0 %v1188
        %v1190 = vpop.xlane.xlu0 %1189
        %v1191 = vsel %vm939, %v1187, -inf
        %1192 = vmax.xlane.f32.xlu0 %v1191
        %v1193 = vpop.xlane.xlu0 %1192
        %v1194 = vsub.f32 %v1186, %v1190
        %v1195 = vsub.f32 %v1187, %v1193
        %v1196 = vmul.f32 %v1194, 1.442695
        %v1197 = vpow.pop %v1196
        %v1198 = vmul.f32 %v1195, 1.442695
        %v1199 = vpow.pop %v1198
        %v1200 = vsel %vm939, %v1197, 0.0
        %1201 = vadd.xlane.f32.xlu0 %v1200
        %v1202 = vpop.xlane.xlu0 %1201
        %v1203 = vsel %vm939, %v1199, 0.0
        %1204 = vadd.xlane.f32.xlu0 %v1203
        %v1205 = vpop.xlane.xlu0 %1204
        %v1206 = vrcp.pop %v1202
        %v1207 = vmul.f32 %v1202, %v1206
        %v1208 = vsub.f32 1.0, %v1207
        %v1209 = vmul.f32 %v1206, %v1208
        %v1210 = vadd.f32 %v1206, %v1209
        %vm1211 = vweird.f32 %v1202
        %vm1212 = vweird.f32 %v1206
        %vm1213 = vmor %vm1211, %vm1212
        %v1214 = vsel %vm1213, %v1206, %v1210
        %v1215 = vand.u32 2147483647, %v1202
        %vm1216 = vcmp.eq.f32.partialorder %v1215, 8.507059e+37
        %v1217 = vand.u32 %v1202, 2147483648
        %v1218 = vor.u32 1.1754944e-38, %v1217
        %v1219 = vsel %vm1216, %v1218, %v1214
        %v1220 = vmul.f32 %v1197, %v1219
        %v1221 = vrcp.pop %v1205
        %v1222 = vmul.f32 %v1205, %v1221
        %v1223 = vsub.f32 1.0, %v1222
        %v1224 = vmul.f32 %v1221, %v1223
        %v1225 = vadd.f32 %v1221, %v1224
        %vm1226 = vweird.f32 %v1205
        %vm1227 = vweird.f32 %v1221
        %vm1228 = vmor %vm1226, %vm1227
        %v1229 = vsel %vm1228, %v1221, %v1225
        %v1230 = vand.u32 2147483647, %v1205
        %vm1231 = vcmp.eq.f32.partialorder %v1230, 8.507059e+37
        %v1232 = vand.u32 %v1205, 2147483648
        %v1233 = vor.u32 1.1754944e-38, %v1232
        %v1234 = vsel %vm1231, %v1233, %v1229
        %v1235 = vmul.f32 %v1199, %v1234
        %1236 = vrot.lane.b32.xlu0 %v893, 64
        %v1237 = vpop.permute.xlu0 %1236
        %1238 = vrot.lane.b32.xlu0 %v896, 64
        %v1239 = vpop.permute.xlu0 %1238
        %v1243 = vsel %vm939, %v1220, 0
        %v1246 = vsel %vm939, %v1235, 0
        %1248 = vmatpush.msra.mxu0 0.0
        %1249 = vmatpush.msra.mxu0 0.0
        %1250 = vmatpush.msra.mxu0 0.0
        %1251 = vmatpush.msra.mxu0 0.0
        %1252 = vmatpush.msra.mxu0 0.0
        %1253 = vmatpush.msra.mxu0 0.0
        %1254 = vmatpush.msra.mxu0 0.0
        %1255 = vmatpush.msra.mxu0 0.0
        %1256 = vmatpush.msra.mxu0 0.0
        %1257 = vmatpush.msra.mxu0 0.0
        %1258 = vmatpush.msra.mxu0 0.0
        %1259 = vmatpush.msra.mxu0 0.0
        %1260 = vmatpush.msra.mxu0 0.0
        %1261 = vmatpush.msra.mxu0 0.0
        %1262 = vmatpush.msra.mxu0 %v1239
        %1263 = vmatpush.msra.mxu0 %v1237
        %1264 = vmatmul.f32.gmra.mxu0 %v1243
        %v1265 = vpop.f32.mrf.mxu0
        %v1266 = vadd.f32 0.0, %v1265
        %1267 = vmatmul.f32.gmra.mxu0 %v1246
        %v1268 = vpop.f32.mrf.mxu0
        %v1269 = vadd.f32 0.0, %v1268
        %1270 = vdwg.mxu0
        %1271 = vrot.lane.b32.xlu0 %v839, 32
        %v1272 = vpop.permute.xlu0 %1271
        %1273 = vrot.lane.b32.xlu0 %v842, 32
        %v1274 = vpop.permute.xlu0 %1273
        %1275 = vrot.lane.b32.xlu0 %v866, 32
        %v1276 = vpop.permute.xlu0 %1275
        %1277 = vrot.lane.b32.xlu0 %v869, 32
        %v1278 = vpop.permute.xlu0 %1277
        %v1279 = vsel %vm814, %v1272, 0
        %v1281 = vsel %vm814, %v1274, 0
        %v1283 = vsel %vm814, %v1276, 0
        %v1285 = vsel %vm814, %v1278, 0
        %1287 = vmatpush.xpose.msra.mxu0 0.0
        %1288 = vmatpush.xpose.msra.mxu0 0.0
        %1289 = vmatpush.xpose.msra.mxu0 0.0
        %1290 = vmatpush.xpose.msra.mxu0 0.0
        %1291 = vmatpush.xpose.msra.mxu0 0.0
        %1292 = vmatpush.xpose.msra.mxu0 0.0
        %1293 = vmatpush.xpose.msra.mxu0 0.0
        %1294 = vmatpush.xpose.msra.mxu0 0.0
        %1295 = vmatpush.xpose.msra.mxu0 0.0
        %1296 = vmatpush.xpose.msra.mxu0 0.0
        %1297 = vmatpush.xpose.msra.mxu0 0.0
        %1298 = vmatpush.xpose.msra.mxu0 0.0
        %1299 = vmatpush.xpose.msra.mxu0 0.0
        %1300 = vmatpush.xpose.msra.mxu0 0.0
        %1301 = vmatpush.xpose.msra.mxu0 %v1285
        %1302 = vmatpush.xpose.msra.mxu0 %v1283
        %1303 = vmatmul.f32.gmra.mxu0 %v1279
        %v1304 = vpop.f32.mrf.mxu0
        %v1305 = vadd.f32 0.0, %v1304
        %1306 = vmatmul.f32.gmra.mxu0 %v1281
        %v1307 = vpop.f32.mrf.mxu0
        %v1308 = vadd.f32 0.0, %v1307
        %1309 = vdwg.mxu0
        %v1310 = vmul.f32 %v1305, 0.17677669
        %v1311 = vmul.f32 %v1308, 0.17677669
        %v1312 = vadd.f32 %v1310, %v898
        %v1313 = vadd.f32 %v1311, %v899
        %v1314 = vsel %vm939, %v1312, -inf
        %1315 = vmax.xlane.f32.xlu0 %v1314
        %v1316 = vpop.xlane.xlu0 %1315
        %v1317 = vsel %vm939, %v1313, -inf
        %1318 = vmax.xlane.f32.xlu0 %v1317
        %v1319 = vpop.xlane.xlu0 %1318
        %v1320 = vsub.f32 %v1312, %v1316
        %v1321 = vsub.f32 %v1313, %v1319
        %v1322 = vmul.f32 %v1320, 1.442695
        %v1323 = vpow.pop %v1322
        %v1324 = vmul.f32 %v1321, 1.442695
        %v1325 = vpow.pop %v1324
        %v1326 = vsel %vm939, %v1323, 0.0
        %1327 = vadd.xlane.f32.xlu0 %v1326
        %v1328 = vpop.xlane.xlu0 %1327
        %v1329 = vsel %vm939, %v1325, 0.0
        %1330 = vadd.xlane.f32.xlu0 %v1329
        %v1331 = vpop.xlane.xlu0 %1330
        %v1332 = vrcp.pop %v1328
        %v1333 = vmul.f32 %v1328, %v1332
        %v1334 = vsub.f32 1.0, %v1333
        %v1335 = vmul.f32 %v1332, %v1334
        %v1336 = vadd.f32 %v1332, %v1335
        %vm1337 = vweird.f32 %v1328
        %vm1338 = vweird.f32 %v1332
        %vm1339 = vmor %vm1337, %vm1338
        %v1340 = vsel %vm1339, %v1332, %v1336
        %v1341 = vand.u32 2147483647, %v1328
        %vm1342 = vcmp.eq.f32.partialorder %v1341, 8.507059e+37
        %v1343 = vand.u32 %v1328, 2147483648
        %v1344 = vor.u32 1.1754944e-38, %v1343
        %v1345 = vsel %vm1342, %v1344, %v1340
        %v1346 = vmul.f32 %v1323, %v1345
        %v1347 = vrcp.pop %v1331
        %v1348 = vmul.f32 %v1331, %v1347
        %v1349 = vsub.f32 1.0, %v1348
        %v1350 = vmul.f32 %v1347, %v1349
        %v1351 = vadd.f32 %v1347, %v1350
        %vm1352 = vweird.f32 %v1331
        %vm1353 = vweird.f32 %v1347
        %vm1354 = vmor %vm1352, %vm1353
        %v1355 = vsel %vm1354, %v1347, %v1351
        %v1356 = vand.u32 2147483647, %v1331
        %vm1357 = vcmp.eq.f32.partialorder %v1356, 8.507059e+37
        %v1358 = vand.u32 %v1331, 2147483648
        %v1359 = vor.u32 1.1754944e-38, %v1358
        %v1360 = vsel %vm1357, %v1359, %v1355
        %v1361 = vmul.f32 %v1325, %v1360
        %1362 = vrot.lane.b32.xlu0 %v893, 32
        %v1363 = vpop.permute.xlu0 %1362
        %1364 = vrot.lane.b32.xlu0 %v896, 32
        %v1365 = vpop.permute.xlu0 %1364
        %v1369 = vsel %vm939, %v1346, 0
        %v1372 = vsel %vm939, %v1361, 0
        %1374 = vmatpush.msra.mxu0 0.0
        %1375 = vmatpush.msra.mxu0 0.0
        %1376 = vmatpush.msra.mxu0 0.0
        %1377 = vmatpush.msra.mxu0 0.0
        %1378 = vmatpush.msra.mxu0 0.0
        %1379 = vmatpush.msra.mxu0 0.0
        %1380 = vmatpush.msra.mxu0 0.0
        %1381 = vmatpush.msra.mxu0 0.0
        %1382 = vmatpush.msra.mxu0 0.0
        %1383 = vmatpush.msra.mxu0 0.0
        %1384 = vmatpush.msra.mxu0 0.0
        %1385 = vmatpush.msra.mxu0 0.0
        %1386 = vmatpush.msra.mxu0 0.0
        %1387 = vmatpush.msra.mxu0 0.0
        %1388 = vmatpush.msra.mxu0 %v1365
        %1389 = vmatpush.msra.mxu0 %v1363
        %1390 = vmatmul.f32.gmra.mxu0 %v1369
        %v1391 = vpop.f32.mrf.mxu0
        %v1392 = vadd.f32 0.0, %v1391
        %1393 = vmatmul.f32.gmra.mxu0 %v1372
        %v1394 = vpop.f32.mrf.mxu0
        %v1395 = vadd.f32 0.0, %v1394
        %1396 = vdwg.mxu0
        %1399 = vrot.lane.b32.xlu0 %v1140, 32
        %v1400 = vpop.permute.xlu0 %1399
        %1401 = vrot.lane.b32.xlu0 %v1143, 32
        %v1402 = vpop.permute.xlu0 %1401
        %1407 = vrot.lane.b32.xlu0 %v1266, 64
        %v1408 = vpop.permute.xlu0 %1407
        %1409 = vrot.lane.b32.xlu0 %v1269, 64
        %v1410 = vpop.permute.xlu0 %1409
        %1415 = vrot.lane.b32.xlu0 %v1392, 96
        %v1416 = vpop.permute.xlu0 %1415
        %1417 = vrot.lane.b32.xlu0 %v1395, 96
        %v1418 = vpop.permute.xlu0 %1417
        %v1421 = vsel %vm814, %v1012, %v1400
        %v1422 = vsel %vm814, %v1015, %v1402
        %vm1423 = vcmask 523264
        %v1424 = vsel %vm1423, %v1421, %v1408
        %v1425 = vsel %vm1423, %v1422, %v1410
        %vm1426 = vcmask 785408
        %v1427 = vsel %vm1426, %v1424, %v1416
        %v1428 = vsel %vm1426, %v1425, %v1418
        %v1429 = vld [vmem:[%s767] sm:$0xff]
        %v1430 = vld [vmem:[%s767 + $0x8] sm:$0xff]
        %v1431 = vld [vmem:[%s767 + $0x10] sm:$0xff]
        %v1432 = vld [vmem:[%s767 + $0x18] sm:$0xff]
        %v1433 = vld [vmem:[%s767 + $0x20] sm:$0xff]
        %v1434 = vld [vmem:[%s767 + $0x28] sm:$0xff]
        %v1435 = vld [vmem:[%s767 + $0x30] sm:$0xff]
        %v1436 = vld [vmem:[%s767 + $0x38] sm:$0xff]
        %v1437 = vld [vmem:[%s767 + $0x40] sm:$0xff]
        %v1438 = vld [vmem:[%s767 + $0x48] sm:$0xff]
        %v1439 = vld [vmem:[%s767 + $0x50] sm:$0xff]
        %v1440 = vld [vmem:[%s767 + $0x58] sm:$0xff]
        %v1441 = vld [vmem:[%s767 + $0x60] sm:$0xff]
        %v1442 = vld [vmem:[%s767 + $0x68] sm:$0xff]
        %v1443 = vld [vmem:[%s767 + $0x70] sm:$0xff]
        %v1444 = vld [vmem:[%s767 + $0x78] sm:$0xff]
        %v1445 = vld [vmem:[%s770] sm:$0x1]
        %v1447 = vperm.slane %v1445, 0
        %1449 = vmatpush.msra.mxu0 %v1444
        %1450 = vmatpush.msra.mxu0 %v1443
        %1451 = vmatpush.msra.mxu0 %v1442
        %1452 = vmatpush.msra.mxu0 %v1441
        %1453 = vmatpush.msra.mxu0 %v1440
        %1454 = vmatpush.msra.mxu0 %v1439
        %1455 = vmatpush.msra.mxu0 %v1438
        %1456 = vmatpush.msra.mxu0 %v1437
        %1457 = vmatpush.msra.mxu0 %v1436
        %1458 = vmatpush.msra.mxu0 %v1435
        %1459 = vmatpush.msra.mxu0 %v1434
        %1460 = vmatpush.msra.mxu0 %v1433
        %1461 = vmatpush.msra.mxu0 %v1432
        %1462 = vmatpush.msra.mxu0 %v1431
        %1463 = vmatpush.msra.mxu0 %v1430
        %1464 = vmatpush.msra.mxu0 %v1429
        %1465 = vmatmul.f32.gmra.mxu0 %v1427
        %v1466 = vpop.f32.mrf.mxu0
        %v1467 = vadd.f32 %v1447, %v1466
        %1468 = vmatmul.f32.gmra.mxu0 %v1428
        %v1469 = vpop.f32.mrf.mxu0
        %v1470 = vadd.f32 %v1447, %v1469
        %1471 = vdwg.mxu0
        %v1472 = vadd.f32 %v1467, %v808
        %v1473 = vadd.f32 %v1470, %v809
        %v1474 = vld [vmem:[%s773] sm:$0x1]
        %v1475 = vld [vmem:[%s776] sm:$0x1]
        %v1476 = vsel %vm814, %v1472, 0.0
        %1477 = vadd.xlane.f32.xlu0 %v1476
        %v1478 = vpop.xlane.xlu0 %1477
        %v1479 = vsel %vm814, %v1473, 0.0
        %1480 = vadd.xlane.f32.xlu0 %v1479
        %v1481 = vpop.xlane.xlu0 %1480
        %v1482 = vrcp.pop 32.0
        %v1483 = vmul.f32 32.0, %v1482
        %v1484 = vsub.f32 1.0, %v1483
        %v1485 = vmul.f32 %v1482, %v1484
        %v1486 = vadd.f32 %v1482, %v1485
        %vm1487 = vweird.f32 %v1482
        %v1488 = vsel %vm1487, %v1482, %v1486
        %v1489 = vmul.f32 %v1478, %v1488
        %v1490 = vmul.f32 %v1481, %v1488
        %v1491 = vsub.f32 %v1472, %v1489
        %v1492 = vsub.f32 %v1473, %v1490
        %v1493 = vmul.f32 %v1491, %v1491
        %v1494 = vmul.f32 %v1492, %v1492
        %v1495 = vsel %vm814, %v1493, 0.0
        %1496 = vadd.xlane.f32.xlu0 %v1495
        %v1497 = vpop.xlane.xlu0 %1496
        %v1498 = vsel %vm814, %v1494, 0.0
        %1499 = vadd.xlane.f32.xlu0 %v1498
        %v1500 = vpop.xlane.xlu0 %1499
        %v1501 = vmul.f32 %v1497, %v1488
        %v1502 = vmul.f32 %v1500, %v1488
        %v1503 = vadd.f32 %v1501, 1e-05
        %v1504 = vadd.f32 %v1502, 1e-05
        %v1505 = vrsqrt.pop %v1503
        %v1506 = vmul.f32 %v1505, %v1503
        %v1507 = vmul.f32 %v1506, %v1505
        %v1508 = vmul.f32 0.5, %v1507
        %v1509 = vsub.f32 1.5, %v1508
        %v1510 = vmul.f32 %v1505, %v1509
        %vm1511 = vweird.f32 %v1503
        %vm1512 = vweird.f32 %v1505
        %vm1513 = vmor %vm1511, %vm1512
        %v1514 = vsel %vm1513, %v1505, %v1510
        %v1515 = vrsqrt.pop %v1504
        %v1516 = vmul.f32 %v1515, %v1504
        %v1517 = vmul.f32 %v1516, %v1515
        %v1518 = vmul.f32 0.5, %v1517
        %v1519 = vsub.f32 1.5, %v1518
        %v1520 = vmul.f32 %v1515, %v1519
        %vm1521 = vweird.f32 %v1504
        %vm1522 = vweird.f32 %v1515
        %vm1523 = vmor %vm1521, %vm1522
        %v1524 = vsel %vm1523, %v1515, %v1520
        %v1525 = vmul.f32 %v1491, %v1514
        %v1526 = vmul.f32 %v1492, %v1524
        %v1528 = vperm.slane %v1474, 0
        %v1530 = vmul.f32 %v1525, %v1528
        %v1531 = vmul.f32 %v1526, %v1528
        %v1533 = vperm.slane %v1475, 0
        %v1535 = vadd.f32 %v1530, %v1533
        %v1536 = vadd.f32 %v1531, %v1533
        %v1537 = vld [vmem:[%s781] sm:$0xff]
        %v1538 = vld [vmem:[%s781 + $0x8] sm:$0xff]
        %v1539 = vld [vmem:[%s781 + $0x10] sm:$0xff]
        %v1540 = vld [vmem:[%s781 + $0x18] sm:$0xff]
        %v1541 = vld [vmem:[%s784] sm:$0x1]
        %v1543 = vperm.slane %v1541, 0
        %v1546 = vsel %vm814, %v1535, 0
        %v1549 = vsel %vm814, %v1536, 0
        %1551 = vmatpush.msra.mxu0 0.0
        %1552 = vmatpush.msra.mxu0 0.0
        %1553 = vmatpush.msra.mxu0 0.0
        %1554 = vmatpush.msra.mxu0 0.0
        %1555 = vmatpush.msra.mxu0 0.0
        %1556 = vmatpush.msra.mxu0 0.0
        %1557 = vmatpush.msra.mxu0 0.0
        %1558 = vmatpush.msra.mxu0 0.0
        %1559 = vmatpush.msra.mxu0 0.0
        %1560 = vmatpush.msra.mxu0 0.0
        %1561 = vmatpush.msra.mxu0 0.0
        %1562 = vmatpush.msra.mxu0 0.0
        %1563 = vmatpush.msra.mxu0 %v1540
        %1564 = vmatpush.msra.mxu0 %v1539
        %1565 = vmatpush.msra.mxu0 %v1538
        %1566 = vmatpush.msra.mxu0 %v1537
        %1567 = vmatmul.f32.gmra.mxu0 %v1546
        %v1568 = vpop.f32.mrf.mxu0
        %v1569 = vadd.f32 %v1543, %v1568
        %1570 = vmatmul.f32.gmra.mxu0 %v1549
        %v1571 = vpop.f32.mrf.mxu0
        %v1572 = vadd.f32 %v1543, %v1571
        %1573 = vdwg.mxu0
        %v1574 = vmax.f32 %v1569, 0.0
        %v1575 = vmax.f32 %v1572, 0.0
        %v1576 = vld [vmem:[%s789] sm:$0xff]
        %v1577 = vld [vmem:[%s789 + $0x8] sm:$0xff]
        %v1578 = vld [vmem:[%s789 + $0x10] sm:$0xff]
        %v1579 = vld [vmem:[%s789 + $0x18] sm:$0xff]
        %v1580 = vld [vmem:[%s789 + $0x20] sm:$0xff]
        %v1581 = vld [vmem:[%s789 + $0x28] sm:$0xff]
        %v1582 = vld [vmem:[%s789 + $0x30] sm:$0xff]
        %v1583 = vld [vmem:[%s789 + $0x38] sm:$0xff]
        %v1584 = vld [vmem:[%s789 + $0x40] sm:$0xff]
        %v1585 = vld [vmem:[%s789 + $0x48] sm:$0xff]
        %v1586 = vld [vmem:[%s789 + $0x50] sm:$0xff]
        %v1587 = vld [vmem:[%s789 + $0x58] sm:$0xff]
        %v1588 = vld [vmem:[%s789 + $0x60] sm:$0xff]
        %v1589 = vld [vmem:[%s789 + $0x68] sm:$0xff]
        %v1590 = vld [vmem:[%s789 + $0x70] sm:$0xff]
        %v1591 = vld [vmem:[%s789 + $0x78] sm:$0xff]
        %v1592 = vld [vmem:[%s792] sm:$0x1]
        %v1594 = vperm.slane %v1592, 0
        %1596 = vmatpush.msra.mxu0 %v1591
        %1597 = vmatpush.msra.mxu0 %v1590
        %1598 = vmatpush.msra.mxu0 %v1589
        %1599 = vmatpush.msra.mxu0 %v1588
        %1600 = vmatpush.msra.mxu0 %v1587
        %1601 = vmatpush.msra.mxu0 %v1586
        %1602 = vmatpush.msra.mxu0 %v1585
        %1603 = vmatpush.msra.mxu0 %v1584
        %1604 = vmatpush.msra.mxu0 %v1583
        %1605 = vmatpush.msra.mxu0 %v1582
        %1606 = vmatpush.msra.mxu0 %v1581
        %1607 = vmatpush.msra.mxu0 %v1580
        %1608 = vmatpush.msra.mxu0 %v1579
        %1609 = vmatpush.msra.mxu0 %v1578
        %1610 = vmatpush.msra.mxu0 %v1577
        %1611 = vmatpush.msra.mxu0 %v1576
        %1612 = vmatmul.f32.gmra.mxu0 %v1574
        %v1613 = vpop.f32.mrf.mxu0
        %v1614 = vadd.f32 %v1594, %v1613
        %1615 = vmatmul.f32.gmra.mxu0 %v1575
        %v1616 = vpop.f32.mrf.mxu0
        %v1617 = vadd.f32 %v1594, %v1616
        %1618 = vdwg.mxu0
        %v1619 = vadd.f32 %v1614, %v1535
        %v1620 = vadd.f32 %v1617, %v1536
        %v1621 = vld [vmem:[%s795] sm:$0x1]
        %v1622 = vld [vmem:[%s798] sm:$0x1]
        %v1623 = vsel %vm814, %v1619, 0.0
        %1624 = vadd.xlane.f32.xlu0 %v1623
        %v1625 = vpop.xlane.xlu0 %1624
        %v1626 = vsel %vm814, %v1620, 0.0
        %1627 = vadd.xlane.f32.xlu0 %v1626
        %v1628 = vpop.xlane.xlu0 %1627
        %v1629 = vmul.f32 %v1625, %v1488
        %v1630 = vmul.f32 %v1628, %v1488
        %v1631 = vsub.f32 %v1619, %v1629
        %v1632 = vsub.f32 %v1620, %v1630
        %v1633 = vmul.f32 %v1631, %v1631
        %v1634 = vmul.f32 %v1632, %v1632
        %v1635 = vsel %vm814, %v1633, 0.0
        %1636 = vadd.xlane.f32.xlu0 %v1635
        %v1637 = vpop.xlane.xlu0 %1636
        %v1638 = vsel %vm814, %v1634, 0.0
        %1639 = vadd.xlane.f32.xlu0 %v1638
        %v1640 = vpop.xlane.xlu0 %1639
        %v1641 = vmul.f32 %v1637, %v1488
        %v1642 = vmul.f32 %v1640, %v1488
        %v1643 = vadd.f32 %v1641, 1e-05
        %v1644 = vadd.f32 %v1642, 1e-05
        %v1645 = vrsqrt.pop %v1643
        %v1646 = vmul.f32 %v1645, %v1643
        %v1647 = vmul.f32 %v1646, %v1645
        %v1648 = vmul.f32 0.5, %v1647
        %v1649 = vsub.f32 1.5, %v1648
        %v1650 = vmul.f32 %v1645, %v1649
        %vm1651 = vweird.f32 %v1643
        %vm1652 = vweird.f32 %v1645
        %vm1653 = vmor %vm1651, %vm1652
        %v1654 = vsel %vm1653, %v1645, %v1650
        %v1655 = vrsqrt.pop %v1644
        %v1656 = vmul.f32 %v1655, %v1644
        %v1657 = vmul.f32 %v1656, %v1655
        %v1658 = vmul.f32 0.5, %v1657
        %v1659 = vsub.f32 1.5, %v1658
        %v1660 = vmul.f32 %v1655, %v1659
        %vm1661 = vweird.f32 %v1644
        %vm1662 = vweird.f32 %v1655
        %vm1663 = vmor %vm1661, %vm1662
        %v1664 = vsel %vm1663, %v1655, %v1660
        %v1665 = vmul.f32 %v1631, %v1654
        %v1666 = vmul.f32 %v1632, %v1664
        %v1668 = vperm.slane %v1621, 0
        %v1670 = vmul.f32 %v1665, %v1668
        %v1671 = vmul.f32 %v1666, %v1668
        %v1673 = vperm.slane %v1622, 0
        %v1675 = vadd.f32 %v1670, %v1673
        %v1676 = vadd.f32 %v1671, %v1673
        %1677 = vst.msk [vmem:[#allocation2] sm:$0xff] %vm814, %v1675
        %1678 = vst.msk [vmem:[#allocation2 + $0x8] sm:$0xff] %vm814, %v1676
        %p1679 = scmp.eq.s32.totalorder %s35, 1
        // Predicated region
        $region97: #{transformer_decoder_forward.1} parent=91 // pred_check
          %p1680 = pneg %p1679
        $region98: #{transformer_decoder_forward.1} parent=91 // pred_check_branch
          %1682 = sbr.rel (%p1680) target = $region100
        $region99: #{transformer_decoder_forward.1} parent=91 // pred_region
          %v1683 = vld [vmem:[%s2] sm:$0x3]
          %v1684 = vld [vmem:[#allocation2] sm:$0xff]
          %v1685 = vld [vmem:[#allocation2 + $0x8] sm:$0xff]
          %v1687 = vsel %vm939, %v1683, 0
          %1689 = vmatpush.msra.mxu0 0.0
          %1690 = vmatpush.msra.mxu0 0.0
          %1691 = vmatpush.msra.mxu0 0.0
          %1692 = vmatpush.msra.mxu0 0.0
          %1693 = vmatpush.msra.mxu0 0.0
          %1694 = vmatpush.msra.mxu0 0.0
          %1695 = vmatpush.msra.mxu0 0.0
          %1696 = vmatpush.msra.mxu0 0.0
          %1697 = vmatpush.msra.mxu0 0.0
          %1698 = vmatpush.msra.mxu0 0.0
          %1699 = vmatpush.msra.mxu0 0.0
          %1700 = vmatpush.msra.mxu0 0.0
          %1701 = vmatpush.msra.mxu0 0.0
          %1702 = vmatpush.msra.mxu0 0.0
          %1703 = vmatpush.msra.mxu0 %v1685
          %1704 = vmatpush.msra.mxu0 %v1684
          %1705 = vmatmul.f32.gmra.mxu0 %v1687
          %v1706 = vpop.f32.mrf.mxu0
          %v1707 = vadd.f32 0.0, %v1706
          %1708 = vdwg.mxu0
          %v1709 = vld [vmem:[%s16] sm:$0xff]
          %v1710 = vld [vmem:[%s16 + $0x8] sm:$0xff]
          %v1711 = vld [vmem:[%s16 + $0x10] sm:$0xff]
          %v1712 = vld [vmem:[%s16 + $0x18] sm:$0xff]
          %v1713 = vld [vmem:[%s17] sm:$0x1]
          %v1715 = vperm.slane %v1713, 0
          %v1718 = vsel %vm814, %v1707, 0
          %1720 = vmatpush.msra.mxu0 0.0
          %1721 = vmatpush.msra.mxu0 0.0
          %1722 = vmatpush.msra.mxu0 0.0
          %1723 = vmatpush.msra.mxu0 0.0
          %1724 = vmatpush.msra.mxu0 0.0
          %1725 = vmatpush.msra.mxu0 0.0
          %1726 = vmatpush.msra.mxu0 0.0
          %1727 = vmatpush.msra.mxu0 0.0
          %1728 = vmatpush.msra.mxu0 0.0
          %1729 = vmatpush.msra.mxu0 0.0
          %1730 = vmatpush.msra.mxu0 0.0
          %1731 = vmatpush.msra.mxu0 0.0
          %1732 = vmatpush.msra.mxu0 %v1712
          %1733 = vmatpush.msra.mxu0 %v1711
          %1734 = vmatpush.msra.mxu0 %v1710
          %1735 = vmatpush.msra.mxu0 %v1709
          %1736 = vmatmul.f32.gmra.mxu0 %v1718
          %v1737 = vpop.f32.mrf.mxu0
          %v1738 = vadd.f32 %v1715, %v1737
          %1739 = vdwg.mxu0
          %vm1740 = vcmask 1041408
          %v1741 = vsel %vm1740, %v1738, -inf
          %1742 = vmax.xlane.f32.xlu0 %v1741
          %v1743 = vpop.xlane.xlu0 %1742
          %v1744 = vsub.f32 %v1738, %v1743
          %v1745 = vmul.f32 %v1744, 1.442695
          %v1746 = vpow.pop %v1745
          %v1747 = vsel %vm1740, %v1746, 0.0
          %1748 = vadd.xlane.f32.xlu0 %v1747
          %v1749 = vpop.xlane.xlu0 %1748
          %v1750 = vlog2.pop %v1749
          %v1751 = vmul.f32 %v1750, 0.6931472
          %v1752 = vsub.f32 %v1744, %v1751
          %1753 = vst [vmem:[#allocation3] sm:$0x3] %v1752
        $region100: #{transformer_decoder_forward.1} parent=91 // pred_fallthru
          _
        // Predicated region
        $region101: #{transformer_decoder_forward.1} parent=91 // pred_check
          %p1754 = pneg %p508
        $region102: #{transformer_decoder_forward.1} parent=91 // pred_check_branch
          %1756 = sbr.rel (%p1754) target = $region104
        $region103: #{transformer_decoder_forward.1} parent=91 // pred_region
          %1758 = vsyncadd [#allocation4], 0
          %s1759 = smul.addr %s34, 2
          %s1760 = scalar_lea.hbm %s18, %s1759
          %s1762 = sshll.u32 [#allocation3], 4
          %s1763 = int_to_ptr.vmem [resolvable:$true] %s1762
          %s1764 = sshll.u32 %s1760, 4
          %s1765 = int_to_ptr.hbm [resolvable:$true] %s1764
          %1767 = dma.vmem_to_hbm [thread:$0]  %s1763, 32, %s1765, [#allocation4]
        $region104: #{transformer_decoder_forward.1} parent=91 // pred_fallthru
          _
        // Predicated region
        $region105: #{transformer_decoder_forward.1} parent=91 // pred_check
          %p1768 = pneg %p508
        $region106: #{transformer_decoder_forward.1} parent=91 // pred_check_branch
          %1770 = sbr.rel (%p1768) target = $region108
        $region107: #{transformer_decoder_forward.1} parent=91 // pred_region
          %1772 = dma.done [#allocation4], 32
        $region108: #{transformer_decoder_forward.1} parent=91 // pred_fallthru
          _
      $region92: #{transformer_decoder_forward.1} parent=5 // pred_fallthru
        _
      %p1773 = scmp.le.s32.totalorder 2, %s25
      // Predicated region
      $region109: #{transformer_decoder_forward.1} parent=5 // pred_check
        %p1774 = pneg %p1773
      $region110: #{transformer_decoder_forward.1} parent=5 // pred_check_branch
        %1776 = sbr.rel (%p1774) target = $region112
      $region111: #{transformer_decoder_forward.1} parent=5 // pred_region
        %s1777 = ssub.s32 %s25, 2
      $region112: #{transformer_decoder_forward.1} parent=5 // pred_fallthru
        _
    $region6: #{transformer_decoder_forward.1} parent=1 // loop_footer
      %s29 = sadd.s32 1, %s25
    $region7: #{transformer_decoder_forward.1} parent=1 // loop_footer_branch
      %24 = sbr.rel target = $region3
    $region8: #{transformer_decoder_forward.1} parent=1 // loop_exit
      _
    %1778 = vsyncpa [#allocation4], 1
    %s1779 = scalar_lea.sflag [#allocation4], 1
    %1780 = vsyncpa %s1779, 1

</llo_original>
